<compile_context>
chip_gen: v7x
topology: tpu7x:2x2x1
jax: 0.10.0
libtpu: 0.0.40
codegen_flags: <defaults>
</compile_context>

<pallas_src>
import functools

import jax
import jax.numpy as jnp
from jax import lax
from jax.experimental import pallas as pl
from jax.experimental.pallas import tpu as pltpu

EPS = 1e-5      # PyTorch BatchNorm2d default eps
PAD = 16        # bf16 sublane pack: per-tap K segments are padded to this


# ----------------------------------------------------------------------------
# Fused Pallas kernel.  Activations are channel-major (C, H*W) with the
# flattened spatial axis (multiple of 128 here) on the lane axis.
# ----------------------------------------------------------------------------
def _fused_kernel(x1_ref, x2s_ref,
                  wde_ref, bde_ref,
                  w1_ref, b1_ref,
                  w2_ref, b2_ref,
                  w3_ref, b3_ref,
                  w4_ref, b4_ref,
                  o_ref, scr_ref, *, C1, C2, CO, H, W):
    f32 = jnp.float32
    bf16 = jnp.bfloat16
    L = H * W

    # Boundary masks built in-kernel (no extra DMAs).  mask_l zeroes reads of
    # column w-1 at w == 0; mask_r zeroes reads of column w+1 at w == W-1.
    col = jax.lax.broadcasted_iota(jnp.int32, (1, L), 1) % W
    mask_l = (col > 0).astype(bf16)
    mask_r = (col < W - 1).astype(bf16)

    # Zero the scratch once per step: padded K rows must be finite (their
    # weight columns are zero, but uninitialised VMEM could hold NaN/Inf).
    scr_ref[...] = jnp.zeros(scr_ref.shape, scr_ref.dtype)

    def shift(v, s):
        """u[:, l] = v[:, l + s], zero-filled outside [0, L)."""
        if s == 0:
            return v
        c = v.shape[0]
        z = jnp.zeros((c, abs(s)), v.dtype)
        if s > 0:
            return jnp.concatenate([v[:, s:], z], axis=1)
        return jnp.concatenate([z, v[:, :L + s]], axis=1)

    def taps_matmul(taps, w_ref, b_ref):
        """Store each bf16 tap slab at a 16-row-aligned scratch offset, then do
        ONE MXU matmul  W[Cout, ntaps*pad] @ scratch  (bf16 x bf16 -> f32)."""
        pad = w_ref.shape[1] // len(taps)          # static, wrapper-chosen
        for t, v in enumerate(taps):
            scr_ref[t * pad: t * pad + v.shape[0], :] = v
        k = pad * len(taps)
        return jnp.dot(w_ref[...], scr_ref[0:k, :],
                       preferred_element_type=f32) + b_ref[...]

    def conv3x3(x, w_ref, b_ref):
        """3x3 / stride 1 / pad 1 conv of x:(cin, L) bf16 via im2col + 1 matmul.
        The 3 dw-variants are masked once; dh just lane-shifts them by +/-W."""
        variants = (shift(x, -1) * mask_l, x, shift(x, 1) * mask_r)  # dw=-1,0,1
        taps = [shift(v, dh * W) for dh in (-1, 0, 1) for v in variants]
        return taps_matmul(taps, w_ref, b_ref)

    # ---- Deconv k=(1,2) s=(1,2) + BN + ReLU ---------------------------------
    # x2s is x2 zero-stuffed to full width (x2s[:, h*W + 2w] = x2[:, h, w]).
    # Even output columns take tap kw=0 of x2s, odd columns take tap kw=1 of
    # x2s shifted one lane right, so one matmul gives the interleaved output.
    x2s = x2s_ref[0]                                              # (C2, L) bf16
    x2u = jnp.maximum(taps_matmul([x2s, shift(x2s, -1)], wde_ref, bde_ref), 0.0)

    # ---- block_1: conv1(+BN1) and project fused into one matmul -------------
    x_cat = jnp.concatenate([x1_ref[0], x2u.astype(bf16)], axis=0)  # (C1+CO, L)
    z = conv3x3(x_cat, w1_ref, b1_ref)                              # (2*CO, L)
    h1 = jnp.maximum(z[0:CO], 0.0)                                  # conv1->bn1->relu
    res = z[CO:]                                                    # project(x)+bias
    h = jnp.maximum(conv3x3(h1.astype(bf16), w2_ref, b2_ref) + res, 0.0)

    # ---- block_2 (identity residual) -----------------------------------------
    g = jnp.maximum(conv3x3(h.astype(bf16), w3_ref, b3_ref), 0.0)
    out = jnp.maximum(conv3x3(g.astype(bf16), w4_ref, b4_ref) + h, 0.0)

    o_ref[0] = out.astype(o_ref.dtype)


# ----------------------------------------------------------------------------
# Parameter folding / packing + wrapper
# ----------------------------------------------------------------------------
def _fold_bn(bn, pre_bias=None):
    """Inference-mode BatchNorm folded to per-channel (scale, bias)."""
    s = bn["gamma"] / jnp.sqrt(bn["var"] + EPS)
    b = bn["beta"] - bn["mean"] * s
    if pre_bias is not None:
        b = b + s * pre_bias
    return s, b


def _round_up(n, m=PAD):
    return -(-n // m) * m


def _pack_taps(blocks, pad):
    """blocks: list of per-tap (Cout, cin_t) f32 weights -> (Cout, ntaps*pad)
    bf16 with zero columns padding each tap segment to `pad`."""
    co = blocks[0].shape[0]
    cols = []
    for wb in blocks:
        if wb.shape[1] < pad:
            wb = jnp.concatenate(
                [wb, jnp.zeros((co, pad - wb.shape[1]), wb.dtype)], axis=1)
        cols.append(wb)
    return jnp.concatenate(cols, axis=1).astype(jnp.bfloat16)


def _conv_blocks(w_oihw, scale):
    """(Cout, Cin, 3, 3) -> 9 per-tap (Cout, Cin) blocks, BN scale folded, in
    the kernel's tap order (kh outer, kw inner)."""
    w = w_oihw if scale is None else w_oihw * scale[:, None, None, None]
    return [w[:, :, kh, kw] for kh in range(3) for kw in range(3)]


def feature_aggregator(x1_nchw, x2_nchw, p):
    """Pallas forward.  x1: (N, C1, H, 2*W2), x2: (N, C2, H, W2), NCHW float."""
    N, C1, H, W = x1_nchw.shape
    _, C2, H2, W2 = x2_nchw.shape
    CO = p["b1_conv1"].shape[0]
    assert H2 == H and W == 2 * W2 and CO == C2   # module's implicit shape contract
    L = H * W

    f32, bf16 = jnp.float32, jnp.bfloat16

    # --- fold BN (inference) + pack weights for the lane-dense kernel --------
    s_de, b_de = _fold_bn(p["de_bn"], pre_bias=p["de_b"])
    wde = _pack_taps([p["de_w"][:, :, 0, 0].T * s_de[:, None],
                      p["de_w"][:, :, 0, 1].T * s_de[:, None]], _round_up(C2))
    bde = b_de.reshape(CO, 1).astype(f32)

    s1, b1 = _fold_bn(p["b1_bn1"])
    blocks1 = [jnp.concatenate([a, b], axis=0) for a, b in
               zip(_conv_blocks(p["b1_conv1"], s1),
                   _conv_blocks(p["b1_proj_w"], None))]
    w1 = _pack_taps(blocks1, _round_up(C1 + CO))
    b1c = jnp.concatenate([b1, p["b1_proj_b"]]).reshape(2 * CO, 1).astype(f32)

    s2, b2 = _fold_bn(p["b1_bn2"])
    w2, b2c = _pack_taps(_conv_blocks(p["b1_conv2"], s2), _round_up(CO)), b2.reshape(CO, 1).astype(f32)
    s3, b3 = _fold_bn(p["b2_bn1"])
    w3, b3c = _pack_taps(_conv_blocks(p["b2_conv1"], s3), _round_up(CO)), b3.reshape(CO, 1).astype(f32)
    s4, b4 = _fold_bn(p["b2_bn2"])
    w4, b4c = _pack_taps(_conv_blocks(p["b2_conv2"], s4), _round_up(CO)), b4.reshape(CO, 1).astype(f32)

    # --- bf16 activations; flatten spatial onto lanes; zero-stuff x2 ----------
    x1f = x1_nchw.astype(bf16).reshape(N, C1, L)
    x2b = x2_nchw.astype(bf16)
    x2s = jnp.stack([x2b, jnp.zeros_like(x2b)], axis=-1).reshape(N, C2, L)

    scr_rows = max(9 * _round_up(C1 + CO), 9 * _round_up(CO), 2 * _round_up(C2))

    kern = functools.partial(_fused_kernel, C1=C1, C2=C2, CO=CO, H=H, W=W)
    fixed = lambda n: (0, 0)
    out = pl.pallas_call(
        kern,
        out_shape=jax.ShapeDtypeStruct((N, CO, L), jnp.float32),
        grid=(N,),
        in_specs=[
            pl.BlockSpec((1, C1, L), lambda n: (n, 0, 0)),     # x1 (bf16)
            pl.BlockSpec((1, C2, L), lambda n: (n, 0, 0)),     # zero-stuffed x2
            pl.BlockSpec(wde.shape, fixed), pl.BlockSpec(bde.shape, fixed),
            pl.BlockSpec(w1.shape, fixed), pl.BlockSpec(b1c.shape, fixed),
            pl.BlockSpec(w2.shape, fixed), pl.BlockSpec(b2c.shape, fixed),
            pl.BlockSpec(w3.shape, fixed), pl.BlockSpec(b3c.shape, fixed),
            pl.BlockSpec(w4.shape, fixed), pl.BlockSpec(b4c.shape, fixed),
        ],
        out_specs=pl.BlockSpec((1, CO, L), lambda n: (n, 0, 0)),
        scratch_shapes=[pltpu.VMEM((scr_rows, L), jnp.bfloat16)],   # bf16 im2col
        compiler_params=pltpu.CompilerParams(
            dimension_semantics=("parallel",)),
    )(x1f, x2s, wde, bde, w1, b1c, w2, b2c, w3, b3c, w4, b4c)
    return out.reshape(N, CO, H, W)


# ----------------------------------------------------------------------------
# Plain-JAX reference: pure f32, unfolded BatchNorm, lax convs (independent
# decomposition; no bf16 anywhere so it runs on any backend).
# ----------------------------------------------------------------------------
def _ref_forward(x1, x2, p):
    hi = lax.Precision.HIGHEST

    def bn(y, b):
        r = lambda v: v.reshape(1, -1, 1, 1)
        return (y - r(b["mean"])) / jnp.sqrt(r(b["var"]) + EPS) * r(b["gamma"]) + r(b["beta"])

    def conv3(x, w, bias=None):
        y = lax.conv_general_dilated(x, w, (1, 1), ((1, 1), (1, 1)),
                                     dimension_numbers=("NCHW", "OIHW", "NCHW"),
                                     precision=hi)
        return y if bias is None else y + bias.reshape(1, -1, 1, 1)

    N, C2, H, W2 = x2.shape
    CO = p["b1_conv1"].shape[0]

    # ConvTranspose2d k=(1,2), s=(1,2), p=0:
    #   out[n, co, h, 2w + kw] = sum_ci x[n, ci, h, w] * Wt[ci, co, 0, kw] + b[co]
    taps = [jnp.einsum("nchw,cd->ndhw", x2, p["de_w"][:, :, 0, k], precision=hi)
            for k in (0, 1)]
    y = jnp.stack(taps, axis=-1).reshape(N, CO, H, 2 * W2) + p["de_b"].reshape(1, CO, 1, 1)
    x2u = jnp.maximum(bn(y, p["de_bn"]), 0.0)

    x = jnp.concatenate([x1, x2u], axis=1)
    h1 = jnp.maximum(bn(conv3(x, p["b1_conv1"]), p["b1_bn1"]), 0.0)
    res = conv3(x, p["b1_proj_w"], p["b1_proj_b"])
    h = jnp.maximum(bn(conv3(h1, p["b1_conv2"]), p["b1_bn2"]) + res, 0.0)
    g = jnp.maximum(bn(conv3(h, p["b2_conv1"]), p["b2_bn1"]), 0.0)
    return jnp.maximum(bn(conv3(g, p["b2_conv2"]), p["b2_bn2"]) + h, 0.0)


# ----------------------------------------------------------------------------
def init_params(key, c1, c2, cout):
    ks = iter(jax.random.split(key, 32))

    def randn(shape, scale=0.1):
        return jax.random.normal(next(ks), shape, jnp.float32) * scale

    def bn(c):
        return dict(
            gamma=jax.random.uniform(next(ks), (c,), jnp.float32, 0.5, 1.5),
            beta=randn((c,)),
            mean=randn((c,)),
            var=jax.random.uniform(next(ks), (c,), jnp.float32, 0.5, 1.5),
        )

    cin1 = c1 + c2
    p = {}
    p["de_w"] = randn((c2, cout, 1, 2))          # ConvTranspose2d weight (in, out, 1, 2)
    p["de_b"] = randn((cout,))
    p["de_bn"] = bn(cout)
    p["b1_conv1"] = randn((cout, cin1, 3, 3));   p["b1_bn1"] = bn(cout)
    p["b1_conv2"] = randn((cout, cout, 3, 3));   p["b1_bn2"] = bn(cout)
    p["b1_proj_w"] = randn((cout, cin1, 3, 3));  p["b1_proj_b"] = randn((cout,))
    p["b2_conv1"] = randn((cout, cout, 3, 3));   p["b2_bn1"] = bn(cout)
    p["b2_conv2"] = randn((cout, cout, 3, 3));   p["b2_bn2"] = bn(cout)
    return p


if __name__ == "__main__":
    key = jax.random.PRNGKey(0)
    k1, k2, kp = jax.random.split(key, 3)

    # Feature_Aggregator(in_channels_1=4, in_channels_2=4, out_channels=4)
    # (out_channels == in_channels_2 is required by the module's concat shapes)
    N, C1, C2, COUT, H, W2 = 2, 4, 4, 4, 16, 8
    x1 = jax.random.normal(k1, (N, C1, H, 2 * W2), jnp.float32)   # NCHW
    x2 = jax.random.normal(k2, (N, C2, H, W2), jnp.float32)       # NCHW
    params = init_params(kp, C1, C2, COUT)

    fwd = jax.jit(feature_aggregator)
    out = jax.block_until_ready(fwd(x1, x2, params))
    ref = jax.block_until_ready(_ref_forward(x1, x2, params))

    assert out.shape == (N, COUT, H, 2 * W2), out.shape
    err = float(jnp.max(jnp.abs(out - ref)))
    scale = float(jnp.max(jnp.abs(ref)))
    # Kernel matmuls are intentionally bf16 x bf16 -> f32; reference is pure f32.
    assert err <= 1e-3 + 3e-2 * scale, f"max abs err {err} (ref max {scale})"
    print("KERNEL_OK")
</pallas_src>

<mosaic_0001>
module attributes {stable_mosaic.version = 11 : i64} {
  func.func @_fused_kernel(%arg0: i32, %arg1: memref<1x4x256xbf16, #tpu.memory_space<vmem>>, %arg2: memref<1x4x256xbf16, #tpu.memory_space<vmem>>, %arg3: memref<4x32xbf16, #tpu.memory_space<vmem>>, %arg4: memref<4x1xf32, #tpu.memory_space<vmem>>, %arg5: memref<8x144xbf16, #tpu.memory_space<vmem>>, %arg6: memref<8x1xf32, #tpu.memory_space<vmem>>, %arg7: memref<4x144xbf16, #tpu.memory_space<vmem>>, %arg8: memref<4x1xf32, #tpu.memory_space<vmem>>, %arg9: memref<4x144xbf16, #tpu.memory_space<vmem>>, %arg10: memref<4x1xf32, #tpu.memory_space<vmem>>, %arg11: memref<4x144xbf16, #tpu.memory_space<vmem>>, %arg12: memref<4x1xf32, #tpu.memory_space<vmem>>, %arg13: memref<1x4x256xf32, #tpu.memory_space<vmem>>, %arg14: memref<144x256xbf16, #tpu.memory_space<vmem>>) attributes {dimension_semantics = [#tpu.dimension_semantics<parallel>], iteration_bounds = array<i64: 2>, scalar_prefetch = 0 : i64, scratch_operands = 1 : i64, tpu.core_type = #tpu.core_type<tc>, window_params = [{transform_indices = @transform_0, window_bounds = array<i64: 1, 4, 256>}, {transform_indices = @transform_1, window_bounds = array<i64: 1, 4, 256>}, {pipeline_mode = #tpu.pipeline_mode<synchronous>, transform_indices = @transform_2, window_bounds = array<i64: 4, 32>}, {pipeline_mode = #tpu.pipeline_mode<synchronous>, transform_indices = @transform_3, window_bounds = array<i64: 4, 1>}, {pipeline_mode = #tpu.pipeline_mode<synchronous>, transform_indices = @transform_4, window_bounds = array<i64: 8, 144>}, {pipeline_mode = #tpu.pipeline_mode<synchronous>, transform_indices = @transform_5, window_bounds = array<i64: 8, 1>}, {pipeline_mode = #tpu.pipeline_mode<synchronous>, transform_indices = @transform_6, window_bounds = array<i64: 4, 144>}, {pipeline_mode = #tpu.pipeline_mode<synchronous>, transform_indices = @transform_7, window_bounds = array<i64: 4, 1>}, {pipeline_mode = #tpu.pipeline_mode<synchronous>, transform_indices = @transform_8, window_bounds = array<i64: 4, 144>}, {pipeline_mode = #tpu.pipeline_mode<synchronous>, transform_indices = @transform_9, window_bounds = array<i64: 4, 1>}, {pipeline_mode = #tpu.pipeline_mode<synchronous>, transform_indices = @transform_10, window_bounds = array<i64: 4, 144>}, {pipeline_mode = #tpu.pipeline_mode<synchronous>, transform_indices = @transform_11, window_bounds = array<i64: 4, 1>}, {transform_indices = @transform_12, window_bounds = array<i64: 1, 4, 256>}]} {
    %0 = tpu.iota {dimensions = array<i32: 1>} : vector<1x256xi32>
    %c16_i32 = arith.constant 16 : i32
    %c0_i32 = arith.constant 0 : i32
    %1 = arith.cmpi eq, %c16_i32, %c0_i32 : i32
    %c1_i32 = arith.constant 1 : i32
    %2 = arith.select %1, %c1_i32, %c16_i32 : i32
    %3 = vector.broadcast %2 : i32 to vector<1x256xi32>
    %4 = arith.remsi %0, %3 : vector<1x256xi32>
    %c0_i32_0 = arith.constant 0 : i32
    %5 = vector.broadcast %c0_i32_0 : i32 to vector<1x256xi32>
    %6 = arith.cmpi ne, %4, %5 : vector<1x256xi32>
    %c0_i32_1 = arith.constant 0 : i32
    %7 = vector.broadcast %c0_i32_1 : i32 to vector<1x256xi32>
    %8 = arith.cmpi slt, %4, %7 : vector<1x256xi32>
    %c0_i32_2 = arith.constant 0 : i32
    %9 = arith.cmpi slt, %2, %c0_i32_2 : i32
    %10 = vector.broadcast %9 : i1 to vector<1x256xi1>
    %11 = vector.broadcast %10 : vector<1x256xi1> to vector<1x256xi1>
    %12 = arith.xori %8, %11 : vector<1x256xi1>
    %13 = arith.andi %12, %6 : vector<1x256xi1>
    %14 = vector.broadcast %2 : i32 to vector<1x256xi32>
    %15 = arith.addi %4, %14 : vector<1x256xi32>
    %16 = arith.select %13, %15, %4 : vector<1x256xi1>, vector<1x256xi32>
    %c0_i32_3 = arith.constant 0 : i32
    %17 = vector.broadcast %c0_i32_3 : i32 to vector<1x256xi32>
    %18 = arith.cmpi sgt, %16, %17 : vector<1x256xi32>
    %19 = arith.extui %18 : vector<1x256xi1> to vector<1x256xi32>
    %20 = arith.sitofp %19 : vector<1x256xi32> to vector<1x256xf32>
    %21 = arith.truncf %20 : vector<1x256xf32> to vector<1x256xbf16>
    %c15_i32 = arith.constant 15 : i32
    %22 = vector.broadcast %c15_i32 : i32 to vector<1x256xi32>
    %23 = arith.cmpi slt, %16, %22 : vector<1x256xi32>
    %24 = arith.extui %23 : vector<1x256xi1> to vector<1x256xi32>
    %25 = arith.sitofp %24 : vector<1x256xi32> to vector<1x256xf32>
    %26 = arith.truncf %25 : vector<1x256xf32> to vector<1x256xbf16>
    %cst = arith.constant 0.000000e+00 : bf16
    %27 = vector.broadcast %cst : bf16 to vector<144x256xbf16>
    %c0 = arith.constant 0 : index
    %c0_4 = arith.constant 0 : index
    %28 = vector.load %arg14[%c0, %c0_4] : memref<144x256xbf16, #tpu.memory_space<vmem>>, vector<144x256xbf16>
    tpu.vector_store %arg14[%c0, %c0_4], %27 {strides = array<i32>} : memref<144x256xbf16, #tpu.memory_space<vmem>>, vector<144x256xbf16>,
    %c0_5 = arith.constant 0 : index
    %c0_6 = arith.constant 0 : index
    %c0_7 = arith.constant 0 : index
    %29 = vector.load %arg2[%c0_5, %c0_6, %c0_7] : memref<1x4x256xbf16, #tpu.memory_space<vmem>>, vector<1x4x256xbf16>
    %30 = vector.shape_cast %29 : vector<1x4x256xbf16> to vector<4x256xbf16>
    %cst_8 = arith.constant 0.000000e+00 : bf16
    %31 = vector.broadcast %cst_8 : bf16 to vector<4x1xbf16>
    %32 = vector.extract_strided_slice %30 {offsets = [0, 0], sizes = [4, 255], strides = [1, 1]} : vector<4x256xbf16> to vector<4x255xbf16>
    %33 = tpu.concatenate %31, %32 in 1 : vector<4x1xbf16>, vector<4x255xbf16> -> vector<4x256xbf16>
    %c0_9 = arith.constant 0 : index
    %c0_10 = arith.constant 0 : index
    %34 = vector.load %arg14[%c0_9, %c0_10] : memref<144x256xbf16, #tpu.memory_space<vmem>>, vector<4x256xbf16>
    tpu.vector_store %arg14[%c0_9, %c0_10], %30 {strides = array<i32>} : memref<144x256xbf16, #tpu.memory_space<vmem>>, vector<4x256xbf16>,
    %c16 = arith.constant 16 : index
    %c0_11 = arith.constant 0 : index
    %35 = vector.load %arg14[%c16, %c0_11] : memref<144x256xbf16, #tpu.memory_space<vmem>>, vector<4x256xbf16>
    tpu.vector_store %arg14[%c16, %c0_11], %33 {strides = array<i32>} : memref<144x256xbf16, #tpu.memory_space<vmem>>, vector<4x256xbf16>,
    %c0_12 = arith.constant 0 : index
    %c0_13 = arith.constant 0 : index
    %36 = vector.load %arg3[%c0_12, %c0_13] : memref<4x32xbf16, #tpu.memory_space<vmem>>, vector<4x32xbf16>
    %c0_14 = arith.constant 0 : index
    %c0_15 = arith.constant 0 : index
    %37 = vector.load %arg14[%c0_14, %c0_15] : memref<144x256xbf16, #tpu.memory_space<vmem>>, vector<32x256xbf16>
    %cst_16 = arith.constant dense<0.000000e+00> : vector<4x256xf32>
    %38 = tpu.matmul %36, %37, %cst_16 {dimension_numbers = #tpu.dot_dimension_numbers<[1], [0], [0], [1], [0, 0, 1, 1], [], []>} : vector<4x32xbf16>, vector<32x256xbf16>, vector<4x256xf32> -> vector<4x256xf32>
    %c0_17 = arith.constant 0 : index
    %c0_18 = arith.constant 0 : index
    %39 = vector.load %arg4[%c0_17, %c0_18] : memref<4x1xf32, #tpu.memory_space<vmem>>, vector<4x1xf32>
    %40 = vector.broadcast %39 : vector<4x1xf32> to vector<4x256xf32>
    %41 = arith.addf %38, %40 : vector<4x256xf32>
    %cst_19 = arith.constant 0.000000e+00 : f32
    %42 = vector.broadcast %cst_19 : f32 to vector<4x256xf32>
    %43 = arith.maximumf %41, %42 : vector<4x256xf32>
    %c0_20 = arith.constant 0 : index
    %c0_21 = arith.constant 0 : index
    %c0_22 = arith.constant 0 : index
    %44 = vector.load %arg1[%c0_20, %c0_21, %c0_22] : memref<1x4x256xbf16, #tpu.memory_space<vmem>>, vector<1x4x256xbf16>
    %45 = vector.shape_cast %44 : vector<1x4x256xbf16> to vector<4x256xbf16>
    %46 = arith.truncf %43 : vector<4x256xf32> to vector<4x256xbf16>
    %47 = tpu.concatenate %45, %46 in 0 : vector<4x256xbf16>, vector<4x256xbf16> -> vector<8x256xbf16>
    %cst_23 = arith.constant 0.000000e+00 : bf16
    %48 = vector.broadcast %cst_23 : bf16 to vector<8x1xbf16>
    %49 = vector.extract_strided_slice %47 {offsets = [0, 0], sizes = [8, 255], strides = [1, 1]} : vector<8x256xbf16> to vector<8x255xbf16>
    %50 = tpu.concatenate %48, %49 in 1 : vector<8x1xbf16>, vector<8x255xbf16> -> vector<8x256xbf16>
    %51 = vector.broadcast %21 : vector<1x256xbf16> to vector<8x256xbf16>
    %52 = arith.mulf %50, %51 : vector<8x256xbf16>
    %cst_24 = arith.constant 0.000000e+00 : bf16
    %53 = vector.broadcast %cst_24 : bf16 to vector<8x1xbf16>
    %54 = vector.extract_strided_slice %47 {offsets = [0, 1], sizes = [8, 255], strides = [1, 1]} : vector<8x256xbf16> to vector<8x255xbf16>
    %55 = tpu.concatenate %54, %53 in 1 : vector<8x255xbf16>, vector<8x1xbf16> -> vector<8x256xbf16>
    %56 = vector.broadcast %26 : vector<1x256xbf16> to vector<8x256xbf16>
    %57 = arith.mulf %55, %56 : vector<8x256xbf16>
    %cst_25 = arith.constant 0.000000e+00 : bf16
    %58 = vector.broadcast %cst_25 : bf16 to vector<8x16xbf16>
    %59 = vector.extract_strided_slice %52 {offsets = [0, 0], sizes = [8, 240], strides = [1, 1]} : vector<8x256xbf16> to vector<8x240xbf16>
    %60 = tpu.concatenate %58, %59 in 1 : vector<8x16xbf16>, vector<8x240xbf16> -> vector<8x256xbf16>
    %cst_26 = arith.constant 0.000000e+00 : bf16
    %61 = vector.broadcast %cst_26 : bf16 to vector<8x16xbf16>
    %62 = vector.extract_strided_slice %47 {offsets = [0, 0], sizes = [8, 240], strides = [1, 1]} : vector<8x256xbf16> to vector<8x240xbf16>
    %63 = tpu.concatenate %61, %62 in 1 : vector<8x16xbf16>, vector<8x240xbf16> -> vector<8x256xbf16>
    %cst_27 = arith.constant 0.000000e+00 : bf16
    %64 = vector.broadcast %cst_27 : bf16 to vector<8x16xbf16>
    %65 = vector.extract_strided_slice %57 {offsets = [0, 0], sizes = [8, 240], strides = [1, 1]} : vector<8x256xbf16> to vector<8x240xbf16>
    %66 = tpu.concatenate %64, %65 in 1 : vector<8x16xbf16>, vector<8x240xbf16> -> vector<8x256xbf16>
    %cst_28 = arith.constant 0.000000e+00 : bf16
    %67 = vector.broadcast %cst_28 : bf16 to vector<8x16xbf16>
    %68 = vector.extract_strided_slice %52 {offsets = [0, 16], sizes = [8, 240], strides = [1, 1]} : vector<8x256xbf16> to vector<8x240xbf16>
    %69 = tpu.concatenate %68, %67 in 1 : vector<8x240xbf16>, vector<8x16xbf16> -> vector<8x256xbf16>
    %cst_29 = arith.constant 0.000000e+00 : bf16
    %70 = vector.broadcast %cst_29 : bf16 to vector<8x16xbf16>
    %71 = vector.extract_strided_slice %47 {offsets = [0, 16], sizes = [8, 240], strides = [1, 1]} : vector<8x256xbf16> to vector<8x240xbf16>
    %72 = tpu.concatenate %71, %70 in 1 : vector<8x240xbf16>, vector<8x16xbf16> -> vector<8x256xbf16>
    %cst_30 = arith.constant 0.000000e+00 : bf16
    %73 = vector.broadcast %cst_30 : bf16 to vector<8x16xbf16>
    %74 = vector.extract_strided_slice %57 {offsets = [0, 16], sizes = [8, 240], strides = [1, 1]} : vector<8x256xbf16> to vector<8x240xbf16>
    %75 = tpu.concatenate %74, %73 in 1 : vector<8x240xbf16>, vector<8x16xbf16> -> vector<8x256xbf16>
    %c0_31 = arith.constant 0 : index
    %c0_32 = arith.constant 0 : index
    %76 = vector.load %arg14[%c0_31, %c0_32] : memref<144x256xbf16, #tpu.memory_space<vmem>>, vector<8x256xbf16>
    tpu.vector_store %arg14[%c0_31, %c0_32], %60 {strides = array<i32>} : memref<144x256xbf16, #tpu.memory_space<vmem>>, vector<8x256xbf16>,
    %c16_33 = arith.constant 16 : index
    %c0_34 = arith.constant 0 : index
    %77 = vector.load %arg14[%c16_33, %c0_34] : memref<144x256xbf16, #tpu.memory_space<vmem>>, vector<8x256xbf16>
    tpu.vector_store %arg14[%c16_33, %c0_34], %63 {strides = array<i32>} : memref<144x256xbf16, #tpu.memory_space<vmem>>, vector<8x256xbf16>,
    %c32 = arith.constant 32 : index
    %c0_35 = arith.constant 0 : index
    %78 = vector.load %arg14[%c32, %c0_35] : memref<144x256xbf16, #tpu.memory_space<vmem>>, vector<8x256xbf16>
    tpu.vector_store %arg14[%c32, %c0_35], %66 {strides = array<i32>} : memref<144x256xbf16, #tpu.memory_space<vmem>>, vector<8x256xbf16>,
    %c48 = arith.constant 48 : index
    %c0_36 = arith.constant 0 : index
    %79 = vector.load %arg14[%c48, %c0_36] : memref<144x256xbf16, #tpu.memory_space<vmem>>, vector<8x256xbf16>
    tpu.vector_store %arg14[%c48, %c0_36], %52 {strides = array<i32>} : memref<144x256xbf16, #tpu.memory_space<vmem>>, vector<8x256xbf16>,
    %c64 = arith.constant 64 : index
    %c0_37 = arith.constant 0 : index
    %80 = vector.load %arg14[%c64, %c0_37] : memref<144x256xbf16, #tpu.memory_space<vmem>>, vector<8x256xbf16>
    tpu.vector_store %arg14[%c64, %c0_37], %47 {strides = array<i32>} : memref<144x256xbf16, #tpu.memory_space<vmem>>, vector<8x256xbf16>,
    %c80 = arith.constant 80 : index
    %c0_38 = arith.constant 0 : index
    %81 = vector.load %arg14[%c80, %c0_38] : memref<144x256xbf16, #tpu.memory_space<vmem>>, vector<8x256xbf16>
    tpu.vector_store %arg14[%c80, %c0_38], %57 {strides = array<i32>} : memref<144x256xbf16, #tpu.memory_space<vmem>>, vector<8x256xbf16>,
    %c96 = arith.constant 96 : index
    %c0_39 = arith.constant 0 : index
    %82 = vector.load %arg14[%c96, %c0_39] : memref<144x256xbf16, #tpu.memory_space<vmem>>, vector<8x256xbf16>
    tpu.vector_store %arg14[%c96, %c0_39], %69 {strides = array<i32>} : memref<144x256xbf16, #tpu.memory_space<vmem>>, vector<8x256xbf16>,
    %c112 = arith.constant 112 : index
    %c0_40 = arith.constant 0 : index
    %83 = vector.load %arg14[%c112, %c0_40] : memref<144x256xbf16, #tpu.memory_space<vmem>>, vector<8x256xbf16>
    tpu.vector_store %arg14[%c112, %c0_40], %72 {strides = array<i32>} : memref<144x256xbf16, #tpu.memory_space<vmem>>, vector<8x256xbf16>,
    %c128 = arith.constant 128 : index
    %c0_41 = arith.constant 0 : index
    %84 = vector.load %arg14[%c128, %c0_41] : memref<144x256xbf16, #tpu.memory_space<vmem>>, vector<8x256xbf16>
    tpu.vector_store %arg14[%c128, %c0_41], %75 {strides = array<i32>} : memref<144x256xbf16, #tpu.memory_space<vmem>>, vector<8x256xbf16>,
    %c0_42 = arith.constant 0 : index
    %c0_43 = arith.constant 0 : index
    %85 = vector.load %arg5[%c0_42, %c0_43] : memref<8x144xbf16, #tpu.memory_space<vmem>>, vector<8x144xbf16>
    %c0_44 = arith.constant 0 : index
    %c0_45 = arith.constant 0 : index
    %86 = vector.load %arg14[%c0_44, %c0_45] : memref<144x256xbf16, #tpu.memory_space<vmem>>, vector<144x256xbf16>
    %cst_46 = arith.constant dense<0.000000e+00> : vector<8x256xf32>
    %87 = tpu.matmul %85, %86, %cst_46 {dimension_numbers = #tpu.dot_dimension_numbers<[1], [0], [0], [1], [0, 0, 1, 1], [], []>} : vector<8x144xbf16>, vector<144x256xbf16>, vector<8x256xf32> -> vector<8x256xf32>
    %c0_47 = arith.constant 0 : index
    %c0_48 = arith.constant 0 : index
    %88 = vector.load %arg6[%c0_47, %c0_48] : memref<8x1xf32, #tpu.memory_space<vmem>>, vector<8x1xf32>
    %89 = vector.broadcast %88 : vector<8x1xf32> to vector<8x256xf32>
    %90 = arith.addf %87, %89 : vector<8x256xf32>
    %91 = vector.extract_strided_slice %90 {offsets = [0, 0], sizes = [4, 256], strides = [1, 1]} : vector<8x256xf32> to vector<4x256xf32>
    %cst_49 = arith.constant 0.000000e+00 : f32
    %92 = vector.broadcast %cst_49 : f32 to vector<4x256xf32>
    %93 = arith.maximumf %91, %92 : vector<4x256xf32>
    %94 = vector.extract_strided_slice %90 {offsets = [4, 0], sizes = [4, 256], strides = [1, 1]} : vector<8x256xf32> to vector<4x256xf32>
    %95 = arith.truncf %93 : vector<4x256xf32> to vector<4x256xbf16>
    %cst_50 = arith.constant 0.000000e+00 : bf16
    %96 = vector.broadcast %cst_50 : bf16 to vector<4x1xbf16>
    %97 = vector.extract_strided_slice %95 {offsets = [0, 0], sizes = [4, 255], strides = [1, 1]} : vector<4x256xbf16> to vector<4x255xbf16>
    %98 = tpu.concatenate %96, %97 in 1 : vector<4x1xbf16>, vector<4x255xbf16> -> vector<4x256xbf16>
    %99 = vector.broadcast %21 : vector<1x256xbf16> to vector<4x256xbf16>
    %100 = arith.mulf %98, %99 : vector<4x256xbf16>
    %cst_51 = arith.constant 0.000000e+00 : bf16
    %101 = vector.broadcast %cst_51 : bf16 to vector<4x1xbf16>
    %102 = vector.extract_strided_slice %95 {offsets = [0, 1], sizes = [4, 255], strides = [1, 1]} : vector<4x256xbf16> to vector<4x255xbf16>
    %103 = tpu.concatenate %102, %101 in 1 : vector<4x255xbf16>, vector<4x1xbf16> -> vector<4x256xbf16>
    %104 = vector.broadcast %26 : vector<1x256xbf16> to vector<4x256xbf16>
    %105 = arith.mulf %103, %104 : vector<4x256xbf16>
    %cst_52 = arith.constant 0.000000e+00 : bf16
    %106 = vector.broadcast %cst_52 : bf16 to vector<4x16xbf16>
    %107 = vector.extract_strided_slice %100 {offsets = [0, 0], sizes = [4, 240], strides = [1, 1]} : vector<4x256xbf16> to vector<4x240xbf16>
    %108 = tpu.concatenate %106, %107 in 1 : vector<4x16xbf16>, vector<4x240xbf16> -> vector<4x256xbf16>
    %cst_53 = arith.constant 0.000000e+00 : bf16
    %109 = vector.broadcast %cst_53 : bf16 to vector<4x16xbf16>
    %110 = vector.extract_strided_slice %95 {offsets = [0, 0], sizes = [4, 240], strides = [1, 1]} : vector<4x256xbf16> to vector<4x240xbf16>
    %111 = tpu.concatenate %109, %110 in 1 : vector<4x16xbf16>, vector<4x240xbf16> -> vector<4x256xbf16>
    %cst_54 = arith.constant 0.000000e+00 : bf16
    %112 = vector.broadcast %cst_54 : bf16 to vector<4x16xbf16>
    %113 = vector.extract_strided_slice %105 {offsets = [0, 0], sizes = [4, 240], strides = [1, 1]} : vector<4x256xbf16> to vector<4x240xbf16>
    %114 = tpu.concatenate %112, %113 in 1 : vector<4x16xbf16>, vector<4x240xbf16> -> vector<4x256xbf16>
    %cst_55 = arith.constant 0.000000e+00 : bf16
    %115 = vector.broadcast %cst_55 : bf16 to vector<4x16xbf16>
    %116 = vector.extract_strided_slice %100 {offsets = [0, 16], sizes = [4, 240], strides = [1, 1]} : vector<4x256xbf16> to vector<4x240xbf16>
    %117 = tpu.concatenate %116, %115 in 1 : vector<4x240xbf16>, vector<4x16xbf16> -> vector<4x256xbf16>
    %cst_56 = arith.constant 0.000000e+00 : bf16
    %118 = vector.broadcast %cst_56 : bf16 to vector<4x16xbf16>
    %119 = vector.extract_strided_slice %95 {offsets = [0, 16], sizes = [4, 240], strides = [1, 1]} : vector<4x256xbf16> to vector<4x240xbf16>
    %120 = tpu.concatenate %119, %118 in 1 : vector<4x240xbf16>, vector<4x16xbf16> -> vector<4x256xbf16>
    %cst_57 = arith.constant 0.000000e+00 : bf16
    %121 = vector.broadcast %cst_57 : bf16 to vector<4x16xbf16>
    %122 = vector.extract_strided_slice %105 {offsets = [0, 16], sizes = [4, 240], strides = [1, 1]} : vector<4x256xbf16> to vector<4x240xbf16>
    %123 = tpu.concatenate %122, %121 in 1 : vector<4x240xbf16>, vector<4x16xbf16> -> vector<4x256xbf16>
    %c0_58 = arith.constant 0 : index
    %c0_59 = arith.constant 0 : index
    %124 = vector.load %arg14[%c0_58, %c0_59] : memref<144x256xbf16, #tpu.memory_space<vmem>>, vector<4x256xbf16>
    tpu.vector_store %arg14[%c0_58, %c0_59], %108 {strides = array<i32>} : memref<144x256xbf16, #tpu.memory_space<vmem>>, vector<4x256xbf16>,
    %c16_60 = arith.constant 16 : index
    %c0_61 = arith.constant 0 : index
    %125 = vector.load %arg14[%c16_60, %c0_61] : memref<144x256xbf16, #tpu.memory_space<vmem>>, vector<4x256xbf16>
    tpu.vector_store %arg14[%c16_60, %c0_61], %111 {strides = array<i32>} : memref<144x256xbf16, #tpu.memory_space<vmem>>, vector<4x256xbf16>,
    %c32_62 = arith.constant 32 : index
    %c0_63 = arith.constant 0 : index
    %126 = vector.load %arg14[%c32_62, %c0_63] : memref<144x256xbf16, #tpu.memory_space<vmem>>, vector<4x256xbf16>
    tpu.vector_store %arg14[%c32_62, %c0_63], %114 {strides = array<i32>} : memref<144x256xbf16, #tpu.memory_space<vmem>>, vector<4x256xbf16>,
    %c48_64 = arith.constant 48 : index
    %c0_65 = arith.constant 0 : index
    %127 = vector.load %arg14[%c48_64, %c0_65] : memref<144x256xbf16, #tpu.memory_space<vmem>>, vector<4x256xbf16>
    tpu.vector_store %arg14[%c48_64, %c0_65], %100 {strides = array<i32>} : memref<144x256xbf16, #tpu.memory_space<vmem>>, vector<4x256xbf16>,
    %c64_66 = arith.constant 64 : index
    %c0_67 = arith.constant 0 : index
    %128 = vector.load %arg14[%c64_66, %c0_67] : memref<144x256xbf16, #tpu.memory_space<vmem>>, vector<4x256xbf16>
    tpu.vector_store %arg14[%c64_66, %c0_67], %95 {strides = array<i32>} : memref<144x256xbf16, #tpu.memory_space<vmem>>, vector<4x256xbf16>,
    %c80_68 = arith.constant 80 : index
    %c0_69 = arith.constant 0 : index
    %129 = vector.load %arg14[%c80_68, %c0_69] : memref<144x256xbf16, #tpu.memory_space<vmem>>, vector<4x256xbf16>
    tpu.vector_store %arg14[%c80_68, %c0_69], %105 {strides = array<i32>} : memref<144x256xbf16, #tpu.memory_space<vmem>>, vector<4x256xbf16>,
    %c96_70 = arith.constant 96 : index
    %c0_71 = arith.constant 0 : index
    %130 = vector.load %arg14[%c96_70, %c0_71] : memref<144x256xbf16, #tpu.memory_space<vmem>>, vector<4x256xbf16>
    tpu.vector_store %arg14[%c96_70, %c0_71], %117 {strides = array<i32>} : memref<144x256xbf16, #tpu.memory_space<vmem>>, vector<4x256xbf16>,
    %c112_72 = arith.constant 112 : index
    %c0_73 = arith.constant 0 : index
    %131 = vector.load %arg14[%c112_72, %c0_73] : memref<144x256xbf16, #tpu.memory_space<vmem>>, vector<4x256xbf16>
    tpu.vector_store %arg14[%c112_72, %c0_73], %120 {strides = array<i32>} : memref<144x256xbf16, #tpu.memory_space<vmem>>, vector<4x256xbf16>,
    %c128_74 = arith.constant 128 : index
    %c0_75 = arith.constant 0 : index
    %132 = vector.load %arg14[%c128_74, %c0_75] : memref<144x256xbf16, #tpu.memory_space<vmem>>, vector<4x256xbf16>
    tpu.vector_store %arg14[%c128_74, %c0_75], %123 {strides = array<i32>} : memref<144x256xbf16, #tpu.memory_space<vmem>>, vector<4x256xbf16>,
    %c0_76 = arith.constant 0 : index
    %c0_77 = arith.constant 0 : index
    %133 = vector.load %arg7[%c0_76, %c0_77] : memref<4x144xbf16, #tpu.memory_space<vmem>>, vector<4x144xbf16>
    %c0_78 = arith.constant 0 : index
    %c0_79 = arith.constant 0 : index
    %134 = vector.load %arg14[%c0_78, %c0_79] : memref<144x256xbf16, #tpu.memory_space<vmem>>, vector<144x256xbf16>
    %cst_80 = arith.constant dense<0.000000e+00> : vector<4x256xf32>
    %135 = tpu.matmul %133, %134, %cst_80 {dimension_numbers = #tpu.dot_dimension_numbers<[1], [0], [0], [1], [0, 0, 1, 1], [], []>} : vector<4x144xbf16>, vector<144x256xbf16>, vector<4x256xf32> -> vector<4x256xf32>
    %c0_81 = arith.constant 0 : index
    %c0_82 = arith.constant 0 : index
    %136 = vector.load %arg8[%c0_81, %c0_82] : memref<4x1xf32, #tpu.memory_space<vmem>>, vector<4x1xf32>
    %137 = vector.broadcast %136 : vector<4x1xf32> to vector<4x256xf32>
    %138 = arith.addf %135, %137 : vector<4x256xf32>
    %139 = arith.addf %138, %94 : vector<4x256xf32>
    %cst_83 = arith.constant 0.000000e+00 : f32
    %140 = vector.broadcast %cst_83 : f32 to vector<4x256xf32>
    %141 = arith.maximumf %139, %140 : vector<4x256xf32>
    %142 = arith.truncf %141 : vector<4x256xf32> to vector<4x256xbf16>
    %cst_84 = arith.constant 0.000000e+00 : bf16
    %143 = vector.broadcast %cst_84 : bf16 to vector<4x1xbf16>
    %144 = vector.extract_strided_slice %142 {offsets = [0, 0], sizes = [4, 255], strides = [1, 1]} : vector<4x256xbf16> to vector<4x255xbf16>
    %145 = tpu.concatenate %143, %144 in 1 : vector<4x1xbf16>, vector<4x255xbf16> -> vector<4x256xbf16>
    %146 = vector.broadcast %21 : vector<1x256xbf16> to vector<4x256xbf16>
    %147 = arith.mulf %145, %146 : vector<4x256xbf16>
    %cst_85 = arith.constant 0.000000e+00 : bf16
    %148 = vector.broadcast %cst_85 : bf16 to vector<4x1xbf16>
    %149 = vector.extract_strided_slice %142 {offsets = [0, 1], sizes = [4, 255], strides = [1, 1]} : vector<4x256xbf16> to vector<4x255xbf16>
    %150 = tpu.concatenate %149, %148 in 1 : vector<4x255xbf16>, vector<4x1xbf16> -> vector<4x256xbf16>
    %151 = vector.broadcast %26 : vector<1x256xbf16> to vector<4x256xbf16>
    %152 = arith.mulf %150, %151 : vector<4x256xbf16>
    %cst_86 = arith.constant 0.000000e+00 : bf16
    %153 = vector.broadcast %cst_86 : bf16 to vector<4x16xbf16>
    %154 = vector.extract_strided_slice %147 {offsets = [0, 0], sizes = [4, 240], strides = [1, 1]} : vector<4x256xbf16> to vector<4x240xbf16>
    %155 = tpu.concatenate %153, %154 in 1 : vector<4x16xbf16>, vector<4x240xbf16> -> vector<4x256xbf16>
    %cst_87 = arith.constant 0.000000e+00 : bf16
    %156 = vector.broadcast %cst_87 : bf16 to vector<4x16xbf16>
    %157 = vector.extract_strided_slice %142 {offsets = [0, 0], sizes = [4, 240], strides = [1, 1]} : vector<4x256xbf16> to vector<4x240xbf16>
    %158 = tpu.concatenate %156, %157 in 1 : vector<4x16xbf16>, vector<4x240xbf16> -> vector<4x256xbf16>
    %cst_88 = arith.constant 0.000000e+00 : bf16
    %159 = vector.broadcast %cst_88 : bf16 to vector<4x16xbf16>
    %160 = vector.extract_strided_slice %152 {offsets = [0, 0], sizes = [4, 240], strides = [1, 1]} : vector<4x256xbf16> to vector<4x240xbf16>
    %161 = tpu.concatenate %159, %160 in 1 : vector<4x16xbf16>, vector<4x240xbf16> -> vector<4x256xbf16>
    %cst_89 = arith.constant 0.000000e+00 : bf16
    %162 = vector.broadcast %cst_89 : bf16 to vector<4x16xbf16>
    %163 = vector.extract_strided_slice %147 {offsets = [0, 16], sizes = [4, 240], strides = [1, 1]} : vector<4x256xbf16> to vector<4x240xbf16>
    %164 = tpu.concatenate %163, %162 in 1 : vector<4x240xbf16>, vector<4x16xbf16> -> vector<4x256xbf16>
    %cst_90 = arith.constant 0.000000e+00 : bf16
    %165 = vector.broadcast %cst_90 : bf16 to vector<4x16xbf16>
    %166 = vector.extract_strided_slice %142 {offsets = [0, 16], sizes = [4, 240], strides = [1, 1]} : vector<4x256xbf16> to vector<4x240xbf16>
    %167 = tpu.concatenate %166, %165 in 1 : vector<4x240xbf16>, vector<4x16xbf16> -> vector<4x256xbf16>
    %cst_91 = arith.constant 0.000000e+00 : bf16
    %168 = vector.broadcast %cst_91 : bf16 to vector<4x16xbf16>
    %169 = vector.extract_strided_slice %152 {offsets = [0, 16], sizes = [4, 240], strides = [1, 1]} : vector<4x256xbf16> to vector<4x240xbf16>
    %170 = tpu.concatenate %169, %168 in 1 : vector<4x240xbf16>, vector<4x16xbf16> -> vector<4x256xbf16>
    %c0_92 = arith.constant 0 : index
    %c0_93 = arith.constant 0 : index
    %171 = vector.load %arg14[%c0_92, %c0_93] : memref<144x256xbf16, #tpu.memory_space<vmem>>, vector<4x256xbf16>
    tpu.vector_store %arg14[%c0_92, %c0_93], %155 {strides = array<i32>} : memref<144x256xbf16, #tpu.memory_space<vmem>>, vector<4x256xbf16>,
    %c16_94 = arith.constant 16 : index
    %c0_95 = arith.constant 0 : index
    %172 = vector.load %arg14[%c16_94, %c0_95] : memref<144x256xbf16, #tpu.memory_space<vmem>>, vector<4x256xbf16>
    tpu.vector_store %arg14[%c16_94, %c0_95], %158 {strides = array<i32>} : memref<144x256xbf16, #tpu.memory_space<vmem>>, vector<4x256xbf16>,
    %c32_96 = arith.constant 32 : index
    %c0_97 = arith.constant 0 : index
    %173 = vector.load %arg14[%c32_96, %c0_97] : memref<144x256xbf16, #tpu.memory_space<vmem>>, vector<4x256xbf16>
    tpu.vector_store %arg14[%c32_96, %c0_97], %161 {strides = array<i32>} : memref<144x256xbf16, #tpu.memory_space<vmem>>, vector<4x256xbf16>,
    %c48_98 = arith.constant 48 : index
    %c0_99 = arith.constant 0 : index
    %174 = vector.load %arg14[%c48_98, %c0_99] : memref<144x256xbf16, #tpu.memory_space<vmem>>, vector<4x256xbf16>
    tpu.vector_store %arg14[%c48_98, %c0_99], %147 {strides = array<i32>} : memref<144x256xbf16, #tpu.memory_space<vmem>>, vector<4x256xbf16>,
    %c64_100 = arith.constant 64 : index
    %c0_101 = arith.constant 0 : index
    %175 = vector.load %arg14[%c64_100, %c0_101] : memref<144x256xbf16, #tpu.memory_space<vmem>>, vector<4x256xbf16>
    tpu.vector_store %arg14[%c64_100, %c0_101], %142 {strides = array<i32>} : memref<144x256xbf16, #tpu.memory_space<vmem>>, vector<4x256xbf16>,
    %c80_102 = arith.constant 80 : index
    %c0_103 = arith.constant 0 : index
    %176 = vector.load %arg14[%c80_102, %c0_103] : memref<144x256xbf16, #tpu.memory_space<vmem>>, vector<4x256xbf16>
    tpu.vector_store %arg14[%c80_102, %c0_103], %152 {strides = array<i32>} : memref<144x256xbf16, #tpu.memory_space<vmem>>, vector<4x256xbf16>,
    %c96_104 = arith.constant 96 : index
    %c0_105 = arith.constant 0 : index
    %177 = vector.load %arg14[%c96_104, %c0_105] : memref<144x256xbf16, #tpu.memory_space<vmem>>, vector<4x256xbf16>
    tpu.vector_store %arg14[%c96_104, %c0_105], %164 {strides = array<i32>} : memref<144x256xbf16, #tpu.memory_space<vmem>>, vector<4x256xbf16>,
    %c112_106 = arith.constant 112 : index
    %c0_107 = arith.constant 0 : index
    %178 = vector.load %arg14[%c112_106, %c0_107] : memref<144x256xbf16, #tpu.memory_space<vmem>>, vector<4x256xbf16>
    tpu.vector_store %arg14[%c112_106, %c0_107], %167 {strides = array<i32>} : memref<144x256xbf16, #tpu.memory_space<vmem>>, vector<4x256xbf16>,
    %c128_108 = arith.constant 128 : index
    %c0_109 = arith.constant 0 : index
    %179 = vector.load %arg14[%c128_108, %c0_109] : memref<144x256xbf16, #tpu.memory_space<vmem>>, vector<4x256xbf16>
    tpu.vector_store %arg14[%c128_108, %c0_109], %170 {strides = array<i32>} : memref<144x256xbf16, #tpu.memory_space<vmem>>, vector<4x256xbf16>,
    %c0_110 = arith.constant 0 : index
    %c0_111 = arith.constant 0 : index
    %180 = vector.load %arg9[%c0_110, %c0_111] : memref<4x144xbf16, #tpu.memory_space<vmem>>, vector<4x144xbf16>
    %c0_112 = arith.constant 0 : index
    %c0_113 = arith.constant 0 : index
    %181 = vector.load %arg14[%c0_112, %c0_113] : memref<144x256xbf16, #tpu.memory_space<vmem>>, vector<144x256xbf16>
    %cst_114 = arith.constant dense<0.000000e+00> : vector<4x256xf32>
    %182 = tpu.matmul %180, %181, %cst_114 {dimension_numbers = #tpu.dot_dimension_numbers<[1], [0], [0], [1], [0, 0, 1, 1], [], []>} : vector<4x144xbf16>, vector<144x256xbf16>, vector<4x256xf32> -> vector<4x256xf32>
    %c0_115 = arith.constant 0 : index
    %c0_116 = arith.constant 0 : index
    %183 = vector.load %arg10[%c0_115, %c0_116] : memref<4x1xf32, #tpu.memory_space<vmem>>, vector<4x1xf32>
    %184 = vector.broadcast %183 : vector<4x1xf32> to vector<4x256xf32>
    %185 = arith.addf %182, %184 : vector<4x256xf32>
    %cst_117 = arith.constant 0.000000e+00 : f32
    %186 = vector.broadcast %cst_117 : f32 to vector<4x256xf32>
    %187 = arith.maximumf %185, %186 : vector<4x256xf32>
    %188 = arith.truncf %187 : vector<4x256xf32> to vector<4x256xbf16>
    %cst_118 = arith.constant 0.000000e+00 : bf16
    %189 = vector.broadcast %cst_118 : bf16 to vector<4x1xbf16>
    %190 = vector.extract_strided_slice %188 {offsets = [0, 0], sizes = [4, 255], strides = [1, 1]} : vector<4x256xbf16> to vector<4x255xbf16>
    %191 = tpu.concatenate %189, %190 in 1 : vector<4x1xbf16>, vector<4x255xbf16> -> vector<4x256xbf16>
    %192 = vector.broadcast %21 : vector<1x256xbf16> to vector<4x256xbf16>
    %193 = arith.mulf %191, %192 : vector<4x256xbf16>
    %cst_119 = arith.constant 0.000000e+00 : bf16
    %194 = vector.broadcast %cst_119 : bf16 to vector<4x1xbf16>
    %195 = vector.extract_strided_slice %188 {offsets = [0, 1], sizes = [4, 255], strides = [1, 1]} : vector<4x256xbf16> to vector<4x255xbf16>
    %196 = tpu.concatenate %195, %194 in 1 : vector<4x255xbf16>, vector<4x1xbf16> -> vector<4x256xbf16>
    %197 = vector.broadcast %26 : vector<1x256xbf16> to vector<4x256xbf16>
    %198 = arith.mulf %196, %197 : vector<4x256xbf16>
    %cst_120 = arith.constant 0.000000e+00 : bf16
    %199 = vector.broadcast %cst_120 : bf16 to vector<4x16xbf16>
    %200 = vector.extract_strided_slice %193 {offsets = [0, 0], sizes = [4, 240], strides = [1, 1]} : vector<4x256xbf16> to vector<4x240xbf16>
    %201 = tpu.concatenate %199, %200 in 1 : vector<4x16xbf16>, vector<4x240xbf16> -> vector<4x256xbf16>
    %cst_121 = arith.constant 0.000000e+00 : bf16
    %202 = vector.broadcast %cst_121 : bf16 to vector<4x16xbf16>
    %203 = vector.extract_strided_slice %188 {offsets = [0, 0], sizes = [4, 240], strides = [1, 1]} : vector<4x256xbf16> to vector<4x240xbf16>
    %204 = tpu.concatenate %202, %203 in 1 : vector<4x16xbf16>, vector<4x240xbf16> -> vector<4x256xbf16>
    %cst_122 = arith.constant 0.000000e+00 : bf16
    %205 = vector.broadcast %cst_122 : bf16 to vector<4x16xbf16>
    %206 = vector.extract_strided_slice %198 {offsets = [0, 0], sizes = [4, 240], strides = [1, 1]} : vector<4x256xbf16> to vector<4x240xbf16>
    %207 = tpu.concatenate %205, %206 in 1 : vector<4x16xbf16>, vector<4x240xbf16> -> vector<4x256xbf16>
    %cst_123 = arith.constant 0.000000e+00 : bf16
    %208 = vector.broadcast %cst_123 : bf16 to vector<4x16xbf16>
    %209 = vector.extract_strided_slice %193 {offsets = [0, 16], sizes = [4, 240], strides = [1, 1]} : vector<4x256xbf16> to vector<4x240xbf16>
    %210 = tpu.concatenate %209, %208 in 1 : vector<4x240xbf16>, vector<4x16xbf16> -> vector<4x256xbf16>
    %cst_124 = arith.constant 0.000000e+00 : bf16
    %211 = vector.broadcast %cst_124 : bf16 to vector<4x16xbf16>
    %212 = vector.extract_strided_slice %188 {offsets = [0, 16], sizes = [4, 240], strides = [1, 1]} : vector<4x256xbf16> to vector<4x240xbf16>
    %213 = tpu.concatenate %212, %211 in 1 : vector<4x240xbf16>, vector<4x16xbf16> -> vector<4x256xbf16>
    %cst_125 = arith.constant 0.000000e+00 : bf16
    %214 = vector.broadcast %cst_125 : bf16 to vector<4x16xbf16>
    %215 = vector.extract_strided_slice %198 {offsets = [0, 16], sizes = [4, 240], strides = [1, 1]} : vector<4x256xbf16> to vector<4x240xbf16>
    %216 = tpu.concatenate %215, %214 in 1 : vector<4x240xbf16>, vector<4x16xbf16> -> vector<4x256xbf16>
    %c0_126 = arith.constant 0 : index
    %c0_127 = arith.constant 0 : index
    %217 = vector.load %arg14[%c0_126, %c0_127] : memref<144x256xbf16, #tpu.memory_space<vmem>>, vector<4x256xbf16>
    tpu.vector_store %arg14[%c0_126, %c0_127], %201 {strides = array<i32>} : memref<144x256xbf16, #tpu.memory_space<vmem>>, vector<4x256xbf16>,
    %c16_128 = arith.constant 16 : index
    %c0_129 = arith.constant 0 : index
    %218 = vector.load %arg14[%c16_128, %c0_129] : memref<144x256xbf16, #tpu.memory_space<vmem>>, vector<4x256xbf16>
    tpu.vector_store %arg14[%c16_128, %c0_129], %204 {strides = array<i32>} : memref<144x256xbf16, #tpu.memory_space<vmem>>, vector<4x256xbf16>,
    %c32_130 = arith.constant 32 : index
    %c0_131 = arith.constant 0 : index
    %219 = vector.load %arg14[%c32_130, %c0_131] : memref<144x256xbf16, #tpu.memory_space<vmem>>, vector<4x256xbf16>
    tpu.vector_store %arg14[%c32_130, %c0_131], %207 {strides = array<i32>} : memref<144x256xbf16, #tpu.memory_space<vmem>>, vector<4x256xbf16>,
    %c48_132 = arith.constant 48 : index
    %c0_133 = arith.constant 0 : index
    %220 = vector.load %arg14[%c48_132, %c0_133] : memref<144x256xbf16, #tpu.memory_space<vmem>>, vector<4x256xbf16>
    tpu.vector_store %arg14[%c48_132, %c0_133], %193 {strides = array<i32>} : memref<144x256xbf16, #tpu.memory_space<vmem>>, vector<4x256xbf16>,
    %c64_134 = arith.constant 64 : index
    %c0_135 = arith.constant 0 : index
    %221 = vector.load %arg14[%c64_134, %c0_135] : memref<144x256xbf16, #tpu.memory_space<vmem>>, vector<4x256xbf16>
    tpu.vector_store %arg14[%c64_134, %c0_135], %188 {strides = array<i32>} : memref<144x256xbf16, #tpu.memory_space<vmem>>, vector<4x256xbf16>,
    %c80_136 = arith.constant 80 : index
    %c0_137 = arith.constant 0 : index
    %222 = vector.load %arg14[%c80_136, %c0_137] : memref<144x256xbf16, #tpu.memory_space<vmem>>, vector<4x256xbf16>
    tpu.vector_store %arg14[%c80_136, %c0_137], %198 {strides = array<i32>} : memref<144x256xbf16, #tpu.memory_space<vmem>>, vector<4x256xbf16>,
    %c96_138 = arith.constant 96 : index
    %c0_139 = arith.constant 0 : index
    %223 = vector.load %arg14[%c96_138, %c0_139] : memref<144x256xbf16, #tpu.memory_space<vmem>>, vector<4x256xbf16>
    tpu.vector_store %arg14[%c96_138, %c0_139], %210 {strides = array<i32>} : memref<144x256xbf16, #tpu.memory_space<vmem>>, vector<4x256xbf16>,
    %c112_140 = arith.constant 112 : index
    %c0_141 = arith.constant 0 : index
    %224 = vector.load %arg14[%c112_140, %c0_141] : memref<144x256xbf16, #tpu.memory_space<vmem>>, vector<4x256xbf16>
    tpu.vector_store %arg14[%c112_140, %c0_141], %213 {strides = array<i32>} : memref<144x256xbf16, #tpu.memory_space<vmem>>, vector<4x256xbf16>,
    %c128_142 = arith.constant 128 : index
    %c0_143 = arith.constant 0 : index
    %225 = vector.load %arg14[%c128_142, %c0_143] : memref<144x256xbf16, #tpu.memory_space<vmem>>, vector<4x256xbf16>
    tpu.vector_store %arg14[%c128_142, %c0_143], %216 {strides = array<i32>} : memref<144x256xbf16, #tpu.memory_space<vmem>>, vector<4x256xbf16>,
    %c0_144 = arith.constant 0 : index
    %c0_145 = arith.constant 0 : index
    %226 = vector.load %arg11[%c0_144, %c0_145] : memref<4x144xbf16, #tpu.memory_space<vmem>>, vector<4x144xbf16>
    %c0_146 = arith.constant 0 : index
    %c0_147 = arith.constant 0 : index
    %227 = vector.load %arg14[%c0_146, %c0_147] : memref<144x256xbf16, #tpu.memory_space<vmem>>, vector<144x256xbf16>
    %cst_148 = arith.constant dense<0.000000e+00> : vector<4x256xf32>
    %228 = tpu.matmul %226, %227, %cst_148 {dimension_numbers = #tpu.dot_dimension_numbers<[1], [0], [0], [1], [0, 0, 1, 1], [], []>} : vector<4x144xbf16>, vector<144x256xbf16>, vector<4x256xf32> -> vector<4x256xf32>
    %c0_149 = arith.constant 0 : index
    %c0_150 = arith.constant 0 : index
    %229 = vector.load %arg12[%c0_149, %c0_150] : memref<4x1xf32, #tpu.memory_space<vmem>>, vector<4x1xf32>
    %230 = vector.broadcast %229 : vector<4x1xf32> to vector<4x256xf32>
    %231 = arith.addf %228, %230 : vector<4x256xf32>
    %232 = arith.addf %231, %141 : vector<4x256xf32>
    %cst_151 = arith.constant 0.000000e+00 : f32
    %233 = vector.broadcast %cst_151 : f32 to vector<4x256xf32>
    %234 = arith.maximumf %232, %233 : vector<4x256xf32>
    %c0_152 = arith.constant 0 : index
    %c0_153 = arith.constant 0 : index
    %c0_154 = arith.constant 0 : index
    %235 = vector.load %arg13[%c0_152, %c0_153, %c0_154] : memref<1x4x256xf32, #tpu.memory_space<vmem>>, vector<1x4x256xf32>
    %236 = vector.shape_cast %235 : vector<1x4x256xf32> to vector<4x256xf32>
    %237 = vector.shape_cast %234 : vector<4x256xf32> to vector<1x4x256xf32>
    tpu.vector_store %arg13[%c0_152, %c0_153, %c0_154], %237 {strides = array<i32>} : memref<1x4x256xf32, #tpu.memory_space<vmem>>, vector<1x4x256xf32>,
    return
  }
  func.func @transform_0(%arg0: i32) -> (i32, i32, i32) {
    %c0_i32 = arith.constant 0 : i32
    %c0_i32_0 = arith.constant 0 : i32
    %c0_i32_1 = arith.constant 0 : i32
    return %arg0, %c0_i32, %c0_i32_0 : i32, i32, i32
  }
  func.func @transform_1(%arg0: i32) -> (i32, i32, i32) {
    %c0_i32 = arith.constant 0 : i32
    %c0_i32_0 = arith.constant 0 : i32
    %c0_i32_1 = arith.constant 0 : i32
    return %arg0, %c0_i32, %c0_i32_0 : i32, i32, i32
  }
  func.func @transform_2(%arg0: i32) -> (i32, i32) {
    %c0_i32 = arith.constant 0 : i32
    %c0_i32_0 = arith.constant 0 : i32
    %c0_i32_1 = arith.constant 0 : i32
    return %c0_i32, %c0_i32_0 : i32, i32
  }
  func.func @transform_3(%arg0: i32) -> (i32, i32) {
    %c0_i32 = arith.constant 0 : i32
    %c0_i32_0 = arith.constant 0 : i32
    %c0_i32_1 = arith.constant 0 : i32
    return %c0_i32, %c0_i32_0 : i32, i32
  }
  func.func @transform_4(%arg0: i32) -> (i32, i32) {
    %c0_i32 = arith.constant 0 : i32
    %c0_i32_0 = arith.constant 0 : i32
    %c0_i32_1 = arith.constant 0 : i32
    return %c0_i32, %c0_i32_0 : i32, i32
  }
  func.func @transform_5(%arg0: i32) -> (i32, i32) {
    %c0_i32 = arith.constant 0 : i32
    %c0_i32_0 = arith.constant 0 : i32
    %c0_i32_1 = arith.constant 0 : i32
    return %c0_i32, %c0_i32_0 : i32, i32
  }
  func.func @transform_6(%arg0: i32) -> (i32, i32) {
    %c0_i32 = arith.constant 0 : i32
    %c0_i32_0 = arith.constant 0 : i32
    %c0_i32_1 = arith.constant 0 : i32
    return %c0_i32, %c0_i32_0 : i32, i32
  }
  func.func @transform_7(%arg0: i32) -> (i32, i32) {
    %c0_i32 = arith.constant 0 : i32
    %c0_i32_0 = arith.constant 0 : i32
    %c0_i32_1 = arith.constant 0 : i32
    return %c0_i32, %c0_i32_0 : i32, i32
  }
  func.func @transform_8(%arg0: i32) -> (i32, i32) {
    %c0_i32 = arith.constant 0 : i32
    %c0_i32_0 = arith.constant 0 : i32
    %c0_i32_1 = arith.constant 0 : i32
    return %c0_i32, %c0_i32_0 : i32, i32
  }
  func.func @transform_9(%arg0: i32) -> (i32, i32) {
    %c0_i32 = arith.constant 0 : i32
    %c0_i32_0 = arith.constant 0 : i32
    %c0_i32_1 = arith.constant 0 : i32
    return %c0_i32, %c0_i32_0 : i32, i32
  }
  func.func @transform_10(%arg0: i32) -> (i32, i32) {
    %c0_i32 = arith.constant 0 : i32
    %c0_i32_0 = arith.constant 0 : i32
    %c0_i32_1 = arith.constant 0 : i32
    return %c0_i32, %c0_i32_0 : i32, i32
  }
  func.func @transform_11(%arg0: i32) -> (i32, i32) {
    %c0_i32 = arith.constant 0 : i32
    %c0_i32_0 = arith.constant 0 : i32
    %c0_i32_1 = arith.constant 0 : i32
    return %c0_i32, %c0_i32_0 : i32, i32
  }
  func.func @transform_12(%arg0: i32) -> (i32, i32, i32) {
    %c0_i32 = arith.constant 0 : i32
    %c0_i32_0 = arith.constant 0 : i32
    %c0_i32_1 = arith.constant 0 : i32
    return %arg0, %c0_i32, %c0_i32_0 : i32, i32, i32
  }
}

</mosaic_0001>

<llo_original>
// kernel: feature_aggregator.1
$region0: #{feature_aggregator.1}
  #allocation0 [shape = 'u32[]', space=smem, size = 0x4, offset = 0x4, fixed_abs, tag = 'smem constant byte address 0x4 - core index']
  #allocation1 [shape = 'u32[144,128]{1,0:T(1,128)}', space=vmem, size = 0x12000, scoped, tag = 'internal scratch']
  #allocation2 [shape = 'bf16[144,256]{1,0:T(16,128)(2,1)}', space=vmem, size = 0x12000, scoped, tag = 'scratch operand']
  %s0 = inlined_call_operand.vmem [shape: bf16[2,4,256], index: 0, kind: input, shape index: {}]
  %s1 = inlined_call_operand.vmem [shape: bf16[2,4,256], index: 1, kind: input, shape index: {}]
  %s2 = inlined_call_operand.vmem [shape: bf16[4,32], index: 2, kind: input, shape index: {}]
  %s3 = inlined_call_operand.vmem [shape: f32[4,1], index: 3, kind: input, shape index: {}]
  %s4 = inlined_call_operand.vmem [shape: bf16[8,144], index: 4, kind: input, shape index: {}]
  %s5 = inlined_call_operand.vmem [shape: f32[8,1], index: 5, kind: input, shape index: {}]
  %s6 = inlined_call_operand.vmem [shape: bf16[4,144], index: 6, kind: input, shape index: {}]
  %s7 = inlined_call_operand.vmem [shape: f32[4,1], index: 7, kind: input, shape index: {}]
  %s8 = inlined_call_operand.vmem [shape: bf16[4,144], index: 8, kind: input, shape index: {}]
  %s9 = inlined_call_operand.vmem [shape: f32[4,1], index: 9, kind: input, shape index: {}]
  %s10 = inlined_call_operand.vmem [shape: bf16[4,144], index: 10, kind: input, shape index: {}]
  %s11 = inlined_call_operand.vmem [shape: f32[4,1], index: 11, kind: input, shape index: {}]
  %s12 = inlined_call_operand.vmem [shape: f32[2,4,256], index: 12, kind: output, shape index: {}]
  %s13 = sld [smem:[#allocation0]]
  $region81: #{feature_aggregator.1} parent=0
    _
  %s15 = ssub.s32 1, %s13
  %s16 = scalar_select 0, %s15, %s13
  loop: start=0, step=1, limit=4
  $region2: #{feature_aggregator.1} parent=0 // loop_pre_header
    _
  $region3: #{feature_aggregator.1} parent=0 // loop_header
    %s18 = sphi 0, %s22
    %p19 = scmp.ge.s32.totalorder %s18, 4
    %s28 = sphi 0, %s30
    %s31 = sphi 0, %s28
    %s32 = sphi 0, %s31
    %s48 = sphi 0, %s32
    %s54 = sphi 0, %s56
    %s57 = sphi 0, %s54
    %s58 = sphi 0, %s57
    %s74 = sphi 0, %s58
    %s78 = sphi 0, %s78
    %s80 = sphi 0, %s78
    %s81 = sphi 0, %s80
    %s95 = sphi 0, %s81
    %s99 = sphi 0, %s99
    %s101 = sphi 0, %s99
    %s102 = sphi 0, %s101
    %s116 = sphi 0, %s102
    %s120 = sphi 0, %s120
    %s122 = sphi 0, %s120
    %s123 = sphi 0, %s122
    %s137 = sphi 0, %s123
    %s141 = sphi 0, %s141
    %s143 = sphi 0, %s141
    %s144 = sphi 0, %s143
    %s158 = sphi 0, %s144
    %s162 = sphi 0, %s162
    %s164 = sphi 0, %s162
    %s165 = sphi 0, %s164
    %s179 = sphi 0, %s165
    %s183 = sphi 0, %s183
    %s185 = sphi 0, %s183
    %s186 = sphi 0, %s185
    %s200 = sphi 0, %s186
    %s204 = sphi 0, %s204
    %s206 = sphi 0, %s204
    %s207 = sphi 0, %s206
    %s221 = sphi 0, %s207
    %s225 = sphi 0, %s225
    %s227 = sphi 0, %s225
    %s228 = sphi 0, %s227
    %s242 = sphi 0, %s228
    %s246 = sphi 0, %s246
    %s248 = sphi 0, %s246
    %s249 = sphi 0, %s248
    %s263 = sphi 0, %s249
    %s267 = sphi 0, %s267
    %s269 = sphi 0, %s267
    %s270 = sphi 0, %s269
    %s284 = sphi 0, %s270
    %s290 = sphi 0, %s292
    %s293 = sphi 0, %s290
    %s294 = sphi 0, %s293
    %s310 = sphi 0, %s294
  $region4: #{feature_aggregator.1} parent=0 // loop_header_branch
    %21 = sbr.rel (%p19) target = $region8
  $region5: #{feature_aggregator.1} parent=0 // loop_body
    %s23 = ssub.s32 %s18, 1
    %s24 = ssub.s32 %s18, 2
    %s25 = sadd.s32 %s18, 1
    %s26 = ssub.s32 %s18, %s25
    %p27 = scmp.eq.s32.totalorder %s26, 0
    %s29 = sadd.s32 %s28, 1
    %s30 = scalar_select %p27, %s28, %s29
    %p33 = pneg %p27
    %p34 = scmp.eq.s32.totalorder %s18, 1
    %p35 = por %p33, %p34
    %p36 = scmp.ne.s32.totalorder %s28, %s31
    %p37 = scmp.eq.s32.totalorder %s18, 0
    %p38 = por %p36, %p37
    %p39 = scmp.ne.s32.totalorder %s28, %s31
    %p40 = scmp.eq.s32.totalorder %s23, 1
    %p41 = por %p39, %p40
    %p42 = scmp.ne.s32.totalorder %s31, %s32
    %p43 = scmp.eq.s32.totalorder %s23, 0
    %p44 = por %p42, %p43
    %p45 = scmp.ne.s32.totalorder %s31, %s32
    %p46 = scmp.eq.s32.totalorder %s24, 1
    %p47 = por %p45, %p46
    %p49 = scmp.ne.s32.totalorder %s32, %s48
    %p50 = scmp.eq.s32.totalorder %s24, 0
    %p51 = por %p49, %p50
    %s52 = ssub.s32 %s18, %s25
    %p53 = scmp.eq.s32.totalorder %s52, 0
    %s55 = sadd.s32 %s54, 1
    %s56 = scalar_select %p53, %s54, %s55
    %p59 = pneg %p53
    %p60 = scmp.eq.s32.totalorder %s18, 1
    %p61 = por %p59, %p60
    %p62 = scmp.ne.s32.totalorder %s54, %s57
    %p63 = scmp.eq.s32.totalorder %s18, 0
    %p64 = por %p62, %p63
    %p65 = scmp.ne.s32.totalorder %s54, %s57
    %p66 = scmp.eq.s32.totalorder %s23, 1
    %p67 = por %p65, %p66
    %p68 = scmp.ne.s32.totalorder %s57, %s58
    %p69 = scmp.eq.s32.totalorder %s23, 0
    %p70 = por %p68, %p69
    %p71 = scmp.ne.s32.totalorder %s57, %s58
    %p72 = scmp.eq.s32.totalorder %s24, 1
    %p73 = por %p71, %p72
    %p75 = scmp.ne.s32.totalorder %s58, %s74
    %p76 = scmp.eq.s32.totalorder %s24, 0
    %p77 = por %p75, %p76
    %s79 = sadd.s32 %s78, 1
    %p82 = scmp.eq.s32.totalorder %s18, 1
    %p83 = scmp.ne.s32.totalorder %s78, %s80
    %p84 = scmp.eq.s32.totalorder %s18, 0
    %p85 = por %p83, %p84
    %p86 = scmp.ne.s32.totalorder %s78, %s80
    %p87 = scmp.eq.s32.totalorder %s23, 1
    %p88 = por %p86, %p87
    %p89 = scmp.ne.s32.totalorder %s80, %s81
    %p90 = scmp.eq.s32.totalorder %s23, 0
    %p91 = por %p89, %p90
    %p92 = scmp.ne.s32.totalorder %s80, %s81
    %p93 = scmp.eq.s32.totalorder %s24, 1
    %p94 = por %p92, %p93
    %p96 = scmp.ne.s32.totalorder %s81, %s95
    %p97 = scmp.eq.s32.totalorder %s24, 0
    %p98 = por %p96, %p97
    %s100 = sadd.s32 %s99, 1
    %p103 = scmp.eq.s32.totalorder %s18, 1
    %p104 = scmp.ne.s32.totalorder %s99, %s101
    %p105 = scmp.eq.s32.totalorder %s18, 0
    %p106 = por %p104, %p105
    %p107 = scmp.ne.s32.totalorder %s99, %s101
    %p108 = scmp.eq.s32.totalorder %s23, 1
    %p109 = por %p107, %p108
    %p110 = scmp.ne.s32.totalorder %s101, %s102
    %p111 = scmp.eq.s32.totalorder %s23, 0
    %p112 = por %p110, %p111
    %p113 = scmp.ne.s32.totalorder %s101, %s102
    %p114 = scmp.eq.s32.totalorder %s24, 1
    %p115 = por %p113, %p114
    %p117 = scmp.ne.s32.totalorder %s102, %s116
    %p118 = scmp.eq.s32.totalorder %s24, 0
    %p119 = por %p117, %p118
    %s121 = sadd.s32 %s120, 1
    %p124 = scmp.eq.s32.totalorder %s18, 1
    %p125 = scmp.ne.s32.totalorder %s120, %s122
    %p126 = scmp.eq.s32.totalorder %s18, 0
    %p127 = por %p125, %p126
    %p128 = scmp.ne.s32.totalorder %s120, %s122
    %p129 = scmp.eq.s32.totalorder %s23, 1
    %p130 = por %p128, %p129
    %p131 = scmp.ne.s32.totalorder %s122, %s123
    %p132 = scmp.eq.s32.totalorder %s23, 0
    %p133 = por %p131, %p132
    %p134 = scmp.ne.s32.totalorder %s122, %s123
    %p135 = scmp.eq.s32.totalorder %s24, 1
    %p136 = por %p134, %p135
    %p138 = scmp.ne.s32.totalorder %s123, %s137
    %p139 = scmp.eq.s32.totalorder %s24, 0
    %p140 = por %p138, %p139
    %s142 = sadd.s32 %s141, 1
    %p145 = scmp.eq.s32.totalorder %s18, 1
    %p146 = scmp.ne.s32.totalorder %s141, %s143
    %p147 = scmp.eq.s32.totalorder %s18, 0
    %p148 = por %p146, %p147
    %p149 = scmp.ne.s32.totalorder %s141, %s143
    %p150 = scmp.eq.s32.totalorder %s23, 1
    %p151 = por %p149, %p150
    %p152 = scmp.ne.s32.totalorder %s143, %s144
    %p153 = scmp.eq.s32.totalorder %s23, 0
    %p154 = por %p152, %p153
    %p155 = scmp.ne.s32.totalorder %s143, %s144
    %p156 = scmp.eq.s32.totalorder %s24, 1
    %p157 = por %p155, %p156
    %p159 = scmp.ne.s32.totalorder %s144, %s158
    %p160 = scmp.eq.s32.totalorder %s24, 0
    %p161 = por %p159, %p160
    %s163 = sadd.s32 %s162, 1
    %p166 = scmp.eq.s32.totalorder %s18, 1
    %p167 = scmp.ne.s32.totalorder %s162, %s164
    %p168 = scmp.eq.s32.totalorder %s18, 0
    %p169 = por %p167, %p168
    %p170 = scmp.ne.s32.totalorder %s162, %s164
    %p171 = scmp.eq.s32.totalorder %s23, 1
    %p172 = por %p170, %p171
    %p173 = scmp.ne.s32.totalorder %s164, %s165
    %p174 = scmp.eq.s32.totalorder %s23, 0
    %p175 = por %p173, %p174
    %p176 = scmp.ne.s32.totalorder %s164, %s165
    %p177 = scmp.eq.s32.totalorder %s24, 1
    %p178 = por %p176, %p177
    %p180 = scmp.ne.s32.totalorder %s165, %s179
    %p181 = scmp.eq.s32.totalorder %s24, 0
    %p182 = por %p180, %p181
    %s184 = sadd.s32 %s183, 1
    %p187 = scmp.eq.s32.totalorder %s18, 1
    %p188 = scmp.ne.s32.totalorder %s183, %s185
    %p189 = scmp.eq.s32.totalorder %s18, 0
    %p190 = por %p188, %p189
    %p191 = scmp.ne.s32.totalorder %s183, %s185
    %p192 = scmp.eq.s32.totalorder %s23, 1
    %p193 = por %p191, %p192
    %p194 = scmp.ne.s32.totalorder %s185, %s186
    %p195 = scmp.eq.s32.totalorder %s23, 0
    %p196 = por %p194, %p195
    %p197 = scmp.ne.s32.totalorder %s185, %s186
    %p198 = scmp.eq.s32.totalorder %s24, 1
    %p199 = por %p197, %p198
    %p201 = scmp.ne.s32.totalorder %s186, %s200
    %p202 = scmp.eq.s32.totalorder %s24, 0
    %p203 = por %p201, %p202
    %s205 = sadd.s32 %s204, 1
    %p208 = scmp.eq.s32.totalorder %s18, 1
    %p209 = scmp.ne.s32.totalorder %s204, %s206
    %p210 = scmp.eq.s32.totalorder %s18, 0
    %p211 = por %p209, %p210
    %p212 = scmp.ne.s32.totalorder %s204, %s206
    %p213 = scmp.eq.s32.totalorder %s23, 1
    %p214 = por %p212, %p213
    %p215 = scmp.ne.s32.totalorder %s206, %s207
    %p216 = scmp.eq.s32.totalorder %s23, 0
    %p217 = por %p215, %p216
    %p218 = scmp.ne.s32.totalorder %s206, %s207
    %p219 = scmp.eq.s32.totalorder %s24, 1
    %p220 = por %p218, %p219
    %p222 = scmp.ne.s32.totalorder %s207, %s221
    %p223 = scmp.eq.s32.totalorder %s24, 0
    %p224 = por %p222, %p223
    %s226 = sadd.s32 %s225, 1
    %p229 = scmp.eq.s32.totalorder %s18, 1
    %p230 = scmp.ne.s32.totalorder %s225, %s227
    %p231 = scmp.eq.s32.totalorder %s18, 0
    %p232 = por %p230, %p231
    %p233 = scmp.ne.s32.totalorder %s225, %s227
    %p234 = scmp.eq.s32.totalorder %s23, 1
    %p235 = por %p233, %p234
    %p236 = scmp.ne.s32.totalorder %s227, %s228
    %p237 = scmp.eq.s32.totalorder %s23, 0
    %p238 = por %p236, %p237
    %p239 = scmp.ne.s32.totalorder %s227, %s228
    %p240 = scmp.eq.s32.totalorder %s24, 1
    %p241 = por %p239, %p240
    %p243 = scmp.ne.s32.totalorder %s228, %s242
    %p244 = scmp.eq.s32.totalorder %s24, 0
    %p245 = por %p243, %p244
    %s247 = sadd.s32 %s246, 1
    %p250 = scmp.eq.s32.totalorder %s18, 1
    %p251 = scmp.ne.s32.totalorder %s246, %s248
    %p252 = scmp.eq.s32.totalorder %s18, 0
    %p253 = por %p251, %p252
    %p254 = scmp.ne.s32.totalorder %s246, %s248
    %p255 = scmp.eq.s32.totalorder %s23, 1
    %p256 = por %p254, %p255
    %p257 = scmp.ne.s32.totalorder %s248, %s249
    %p258 = scmp.eq.s32.totalorder %s23, 0
    %p259 = por %p257, %p258
    %p260 = scmp.ne.s32.totalorder %s248, %s249
    %p261 = scmp.eq.s32.totalorder %s24, 1
    %p262 = por %p260, %p261
    %p264 = scmp.ne.s32.totalorder %s249, %s263
    %p265 = scmp.eq.s32.totalorder %s24, 0
    %p266 = por %p264, %p265
    %s268 = sadd.s32 %s267, 1
    %p271 = scmp.eq.s32.totalorder %s18, 1
    %p272 = scmp.ne.s32.totalorder %s267, %s269
    %p273 = scmp.eq.s32.totalorder %s18, 0
    %p274 = por %p272, %p273
    %p275 = scmp.ne.s32.totalorder %s267, %s269
    %p276 = scmp.eq.s32.totalorder %s23, 1
    %p277 = por %p275, %p276
    %p278 = scmp.ne.s32.totalorder %s269, %s270
    %p279 = scmp.eq.s32.totalorder %s23, 0
    %p280 = por %p278, %p279
    %p281 = scmp.ne.s32.totalorder %s269, %s270
    %p282 = scmp.eq.s32.totalorder %s24, 1
    %p283 = por %p281, %p282
    %p285 = scmp.ne.s32.totalorder %s270, %s284
    %p286 = scmp.eq.s32.totalorder %s24, 0
    %p287 = por %p285, %p286
    %s288 = ssub.s32 %s18, %s25
    %p289 = scmp.eq.s32.totalorder %s288, 0
    %s291 = sadd.s32 %s290, 1
    %s292 = scalar_select %p289, %s290, %s291
    %p295 = pneg %p289
    %p296 = scmp.eq.s32.totalorder %s18, 1
    %p297 = por %p295, %p296
    %p298 = scmp.ne.s32.totalorder %s290, %s293
    %p299 = scmp.eq.s32.totalorder %s18, 0
    %p300 = por %p298, %p299
    %p301 = scmp.ne.s32.totalorder %s290, %s293
    %p302 = scmp.eq.s32.totalorder %s23, 1
    %p303 = por %p301, %p302
    %p304 = scmp.ne.s32.totalorder %s293, %s294
    %p305 = scmp.eq.s32.totalorder %s23, 0
    %p306 = por %p304, %p305
    %p307 = scmp.ne.s32.totalorder %s293, %s294
    %p308 = scmp.eq.s32.totalorder %s24, 1
    %p309 = por %p307, %p308
    %p311 = scmp.ne.s32.totalorder %s294, %s310
    %p312 = scmp.eq.s32.totalorder %s24, 0
    %p313 = por %p311, %p312
    %p314 = scmp.le.s32.totalorder 1, %s18
    %p315 = scmp.lt.s32.totalorder %s18, 3
    %p316 = pnand %p314, %p315
    %p317 = pneg %p316
    // Predicated region
    $region9: #{feature_aggregator.1} parent=5 // pred_check
      _
    $region10: #{feature_aggregator.1} parent=5 // pred_check_branch
      %319 = sbr.rel (%p316) target = $region12
    $region11: #{feature_aggregator.1} parent=5 // pred_region
      %s320 = ssub.s32 %s18, 1
      // Predicated region
      $region13: #{feature_aggregator.1} parent=11 // pred_check
        %p321 = pneg %p91
      $region14: #{feature_aggregator.1} parent=11 // pred_check_branch
        %323 = sbr.rel (%p321) target = $region16
      $region15: #{feature_aggregator.1} parent=11 // pred_region
        _
      $region16: #{feature_aggregator.1} parent=11 // pred_fallthru
        _
      // Predicated region
      $region17: #{feature_aggregator.1} parent=11 // pred_check
        %p324 = pneg %p112
      $region18: #{feature_aggregator.1} parent=11 // pred_check_branch
        %326 = sbr.rel (%p324) target = $region20
      $region19: #{feature_aggregator.1} parent=11 // pred_region
        _
      $region20: #{feature_aggregator.1} parent=11 // pred_fallthru
        _
      // Predicated region
      $region21: #{feature_aggregator.1} parent=11 // pred_check
        %p327 = pneg %p133
      $region22: #{feature_aggregator.1} parent=11 // pred_check_branch
        %329 = sbr.rel (%p327) target = $region24
      $region23: #{feature_aggregator.1} parent=11 // pred_region
        _
      $region24: #{feature_aggregator.1} parent=11 // pred_fallthru
        _
      // Predicated region
      $region25: #{feature_aggregator.1} parent=11 // pred_check
        %p330 = pneg %p154
      $region26: #{feature_aggregator.1} parent=11 // pred_check_branch
        %332 = sbr.rel (%p330) target = $region28
      $region27: #{feature_aggregator.1} parent=11 // pred_region
        _
      $region28: #{feature_aggregator.1} parent=11 // pred_fallthru
        _
      // Predicated region
      $region29: #{feature_aggregator.1} parent=11 // pred_check
        %p333 = pneg %p175
      $region30: #{feature_aggregator.1} parent=11 // pred_check_branch
        %335 = sbr.rel (%p333) target = $region32
      $region31: #{feature_aggregator.1} parent=11 // pred_region
        _
      $region32: #{feature_aggregator.1} parent=11 // pred_fallthru
        _
      // Predicated region
      $region33: #{feature_aggregator.1} parent=11 // pred_check
        %p336 = pneg %p196
      $region34: #{feature_aggregator.1} parent=11 // pred_check_branch
        %338 = sbr.rel (%p336) target = $region36
      $region35: #{feature_aggregator.1} parent=11 // pred_region
        _
      $region36: #{feature_aggregator.1} parent=11 // pred_fallthru
        _
      // Predicated region
      $region37: #{feature_aggregator.1} parent=11 // pred_check
        %p339 = pneg %p217
      $region38: #{feature_aggregator.1} parent=11 // pred_check_branch
        %341 = sbr.rel (%p339) target = $region40
      $region39: #{feature_aggregator.1} parent=11 // pred_region
        _
      $region40: #{feature_aggregator.1} parent=11 // pred_fallthru
        _
      // Predicated region
      $region41: #{feature_aggregator.1} parent=11 // pred_check
        %p342 = pneg %p238
      $region42: #{feature_aggregator.1} parent=11 // pred_check_branch
        %344 = sbr.rel (%p342) target = $region44
      $region43: #{feature_aggregator.1} parent=11 // pred_region
        _
      $region44: #{feature_aggregator.1} parent=11 // pred_fallthru
        _
      // Predicated region
      $region45: #{feature_aggregator.1} parent=11 // pred_check
        %p345 = pneg %p259
      $region46: #{feature_aggregator.1} parent=11 // pred_check_branch
        %347 = sbr.rel (%p345) target = $region48
      $region47: #{feature_aggregator.1} parent=11 // pred_region
        _
      $region48: #{feature_aggregator.1} parent=11 // pred_fallthru
        _
      // Predicated region
      $region49: #{feature_aggregator.1} parent=11 // pred_check
        %p348 = pneg %p280
      $region50: #{feature_aggregator.1} parent=11 // pred_check_branch
        %350 = sbr.rel (%p348) target = $region52
      $region51: #{feature_aggregator.1} parent=11 // pred_region
        _
      $region52: #{feature_aggregator.1} parent=11 // pred_fallthru
        _
    $region12: #{feature_aggregator.1} parent=5 // pred_fallthru
      _
    %p351 = scmp.lt.s32.totalorder %s18, 2
    // Predicated region
    $region53: #{feature_aggregator.1} parent=5 // pred_check
      %p352 = pneg %p351
    $region54: #{feature_aggregator.1} parent=5 // pred_check_branch
      %354 = sbr.rel (%p352) target = $region56
    $region55: #{feature_aggregator.1} parent=5 // pred_region
      // Predicated region
      $region57: #{feature_aggregator.1} parent=55 // pred_check
        %p355 = pneg %p38
      $region58: #{feature_aggregator.1} parent=55 // pred_check_branch
        %357 = sbr.rel (%p355) target = $region60
      $region59: #{feature_aggregator.1} parent=55 // pred_region
        %p358 = scmp.lt.s32.totalorder %s18, 1
        %s359 = scalar_select %p358, %s18, 1
        %s360 = smul.addr %s359, 2
        %s361 = smul.addr %s360, 2
        %s362 = scalar_lea.vmem %s0, %s361
      $region60: #{feature_aggregator.1} parent=55 // pred_fallthru
        _
      // Predicated region
      $region61: #{feature_aggregator.1} parent=55 // pred_check
        %p363 = pneg %p64
      $region62: #{feature_aggregator.1} parent=55 // pred_check_branch
        %365 = sbr.rel (%p363) target = $region64
      $region63: #{feature_aggregator.1} parent=55 // pred_region
        %p366 = scmp.lt.s32.totalorder %s18, 1
        %s367 = scalar_select %p366, %s18, 1
        %s368 = smul.addr %s367, 2
        %s369 = smul.addr %s368, 2
        %s370 = scalar_lea.vmem %s1, %s369
      $region64: #{feature_aggregator.1} parent=55 // pred_fallthru
        _
    $region56: #{feature_aggregator.1} parent=5 // pred_fallthru
      _
    %p371 = scmp.le.s32.totalorder 1, %s18
    %p372 = scmp.lt.s32.totalorder %s18, 3
    %p373 = pnand %p371, %p372
    %p374 = pneg %p373
    // Predicated region
    $region65: #{feature_aggregator.1} parent=5 // pred_check
      _
    $region66: #{feature_aggregator.1} parent=5 // pred_check_branch
      %376 = sbr.rel (%p373) target = $region68
    $region67: #{feature_aggregator.1} parent=5 // pred_region
      %s377 = ssub.s32 %s18, 1
      %p378 = scmp.lt.s32.totalorder %s23, 1
      %s379 = scalar_select %p378, %s23, 1
      %s380 = smul.addr %s379, 2
      %s381 = smul.addr %s380, 2
      %s382 = scalar_lea.vmem %s0, %s381
      %p383 = pneg %p44
      %p384 = pneg %p41
      %p385 = scmp.lt.s32.totalorder %s23, 1
      %s386 = scalar_select %p385, %s23, 1
      %s387 = smul.addr %s386, 2
      %s388 = smul.addr %s387, 2
      %s389 = scalar_lea.vmem %s1, %s388
      %p390 = pneg %p70
      %p391 = pneg %p67
      %p392 = pneg %p91
      %p393 = pneg %p88
      %p394 = pneg %p112
      %p395 = pneg %p109
      %p396 = pneg %p133
      %p397 = pneg %p130
      %p398 = pneg %p154
      %p399 = pneg %p151
      %p400 = pneg %p175
      %p401 = pneg %p172
      %p402 = pneg %p196
      %p403 = pneg %p193
      %p404 = pneg %p217
      %p405 = pneg %p214
      %p406 = pneg %p238
      %p407 = pneg %p235
      %p408 = pneg %p259
      %p409 = pneg %p256
      %p410 = pneg %p280
      %p411 = pneg %p277
      %p412 = pneg %p306
      %p413 = pneg %p303
      %p414 = scmp.lt.s32.totalorder %s23, 1
      %s415 = scalar_select %p414, %s23, 1
      %s416 = smul.addr %s415, 2
      %s417 = smul.addr %s416, 4
      %s418 = scalar_lea.vmem %s12, %s417
      %p419 = scmp.lt.s32.totalorder %s23, 1
      %s420 = scalar_select %p419, %s23, 1
      %s421 = smul.addr %s420, 2
      %s422 = smul.addr %s421, 2
      %s423 = scalar_lea.vmem %s0, %s422
      %p424 = scmp.lt.s32.totalorder %s23, 1
      %s425 = scalar_select %p424, %s23, 1
      %s426 = smul.addr %s425, 2
      %s427 = smul.addr %s426, 2
      %s428 = scalar_lea.vmem %s1, %s427
      %p429 = scmp.lt.s32.totalorder %s23, 1
      %s430 = scalar_select %p429, %s23, 1
      %s431 = smul.addr %s430, 2
      %s432 = smul.addr %s431, 4
      %s433 = scalar_lea.vmem %s12, %s432
      %v435 = vlaneseq
      %v436 = vand.u32 %v435, 127
      %v437 = vadd.s32 %v436, 128
      %vm438 = vcmp.lt.s32.totalorder %v436, 0
      %v439 = vsub.s32 0, %v436
      %v440 = vsel %vm438, %v439, %v436
      %v441 = vshrl.u32 %v440, 4
      %v442 = vand.u32 %v440, 15
      %v443 = vsub.s32 0, %v442
      %v444 = vsel %vm438, %v443, %v442
      %vm445 = vcmp.lt.s32.totalorder %v437, 0
      %v446 = vsub.s32 0, %v437
      %v447 = vsel %vm445, %v446, %v437
      %v448 = vshrl.u32 %v447, 4
      %v449 = vand.u32 %v447, 15
      %v450 = vsub.s32 0, %v449
      %v451 = vsel %vm445, %v450, %v449
      %vm452 = vcmp.ne.s32.totalorder %v444, 0
      %vm453 = vcmp.ne.s32.totalorder %v451, 0
      %vm454 = vcmp.lt.s32.totalorder %v444, 0
      %vm455 = vcmp.lt.s32.totalorder %v451, 0
      %vm456 = vmand %vm454, %vm452
      %vm457 = vmand %vm455, %vm453
      %v458 = vadd.s32 %v444, 16
      %v459 = vadd.s32 %v451, 16
      %v460 = vsel %vm456, %v458, %v444
      %v461 = vsel %vm457, %v459, %v451
      %vm462 = vcmp.gt.s32.totalorder %v460, 0
      %vm463 = vcmp.gt.s32.totalorder %v461, 0
      %v464 = vsel %vm462, 1, 0
      %v465 = vsel %vm463, 1, 0
      %v466 = vcvt.s32.f32 %v464
      %v467 = vcvt.s32.f32 %v465
      %v468 = vpack.c.bf16 %v466, %v466
      %v469 = vpack.c.bf16 %v467, %v467
      %vm470 = vcmp.lt.s32.totalorder %v460, 15
      %vm471 = vcmp.lt.s32.totalorder %v461, 15
      %v472 = vsel %vm470, 1, 0
      %v473 = vsel %vm471, 1, 0
      %v474 = vcvt.s32.f32 %v472
      %v475 = vcvt.s32.f32 %v473
      %v476 = vpack.c.bf16 %v474, %v474
      %v477 = vpack.c.bf16 %v475, %v475
      %478 = vst [vmem:[#allocation2] sm:$0xff] 0
      %479 = vst [vmem:[#allocation2 + $0x8] sm:$0xff] 0
      %480 = vst [vmem:[#allocation2 + $0x10] sm:$0xff] 0
      %481 = vst [vmem:[#allocation2 + $0x18] sm:$0xff] 0
      %482 = vst [vmem:[#allocation2 + $0x20] sm:$0xff] 0
      %483 = vst [vmem:[#allocation2 + $0x28] sm:$0xff] 0
      %484 = vst [vmem:[#allocation2 + $0x30] sm:$0xff] 0
      %485 = vst [vmem:[#allocation2 + $0x38] sm:$0xff] 0
      %486 = vst [vmem:[#allocation2 + $0x40] sm:$0xff] 0
      %487 = vst [vmem:[#allocation2 + $0x48] sm:$0xff] 0
      %488 = vst [vmem:[#allocation2 + $0x50] sm:$0xff] 0
      %489 = vst [vmem:[#allocation2 + $0x58] sm:$0xff] 0
      %490 = vst [vmem:[#allocation2 + $0x60] sm:$0xff] 0
      %491 = vst [vmem:[#allocation2 + $0x68] sm:$0xff] 0
      %492 = vst [vmem:[#allocation2 + $0x70] sm:$0xff] 0
      %493 = vst [vmem:[#allocation2 + $0x78] sm:$0xff] 0
      %494 = vst [vmem:[#allocation2 + $0x80] sm:$0xff] 0
      %495 = vst [vmem:[#allocation2 + $0x88] sm:$0xff] 0
      %v496 = vld [vmem:[%s428] sm:$0xf]
      %v499 = vunpack.c.l.s4 1983009808
      %v500 = vunpack.c.0.s8 %v499
      %v501 = vlaneseq
      %v502 = vshrl.u32 %v501, 7
      %v503 = vsub.s32 %v500, %v502
      %v504 = vrot.slane %v496, %v503
      %v505 = vcombine.high %v504, %v504
      %506 = vrot.lane.b32.xlu0 %v504, 1
      %v507 = vpop.permute.xlu0 %506
      %508 = vrot.lane.b32.xlu0 %v505, 1
      %v509 = vpop.permute.xlu0 %508
      %vm510 = vcmask 7168
      %v511 = vsel %vm510, %v507, %v509
      %vm513 = vcmask 7168
      %v516 = vsel %vm513, 0, %v507
      %520 = vst [vmem:[#allocation2] sm:$0x3] %v504
      %521 = vst [vmem:[#allocation2 + $0x8] sm:$0x3] %v505
      %522 = vst [vmem:[#allocation2 + $0x10] sm:$0x3] %v516
      %523 = vst [vmem:[#allocation2 + $0x18] sm:$0x3] %v511
      %v524 = vld [vmem:[%s2] sm:$0x3]
      %v525 = vld [vmem:[#allocation2] sm:$0xff]
      %v526 = vld [vmem:[#allocation2 + $0x8] sm:$0xff]
      %v527 = vld [vmem:[#allocation2 + $0x10] sm:$0xff]
      %v528 = vld [vmem:[#allocation2 + $0x18] sm:$0xff]
      %v529 = vld [vmem:[%s3] sm:$0xf]
      %531 = vset.pattern.permute.xlu0 0
      %532 = vperm.xlu0 %531, %v529
      %v533 = vpop.permute.xlu0 %532
      %vm535 = vcmask 261120
      %v537 = vsel %vm535, %v524, 0
      %539 = vmatprep.subr.bf16.mxu0 %v526
      %540 = vmatpush1.bf16.msra.mxu0 %v525
      %541 = vmatprep.subr.bf16.mxu0 %v528
      %542 = vmatpush1.bf16.msra.mxu0 %v527
      %543 = vmatprep.subr.bf16.mxu0 0
      %544 = vmatpush1.bf16.msra.mxu0 0
      %545 = vmatprep.subr.bf16.mxu0 0
      %546 = vmatpush1.bf16.msra.mxu0 0
      %547 = vmatprep.subr.bf16.mxu0 0
      %548 = vmatpush1.bf16.msra.mxu0 0
      %549 = vmatprep.subr.bf16.mxu0 0
      %550 = vmatpush1.bf16.msra.mxu0 0
      %551 = vmatprep.subr.bf16.mxu0 0
      %552 = vmatpush1.bf16.msra.mxu0 0
      %553 = vmatprep.subr.bf16.mxu0 0
      %554 = vmatpush1.bf16.msra.mxu0 0
      %555 = vmatprep.subr.bf16.mxu0 0
      %556 = vmatpush1.bf16.msra.mxu0 0
      %557 = vmatprep.subr.bf16.mxu0 0
      %558 = vmatpush1.bf16.msra.mxu0 0
      %559 = vmatprep.subr.bf16.mxu0 0
      %560 = vmatpush1.bf16.msra.mxu0 0
      %561 = vmatprep.subr.bf16.mxu0 0
      %562 = vmatpush1.bf16.msra.mxu0 0
      %563 = vmatprep.subr.bf16.mxu0 0
      %564 = vmatpush1.bf16.msra.mxu0 0
      %565 = vmatprep.subr.bf16.mxu0 0
      %566 = vmatpush1.bf16.msra.mxu0 0
      %567 = vmatprep.subr.bf16.mxu0 0
      %568 = vmatpush1.bf16.msra.mxu0 0
      %569 = vmatprep.subr.bf16.mxu0 0
      %570 = vmatpush1.bf16.msra.mxu0 0
      %571 = vmatprep.mubr.bf16.mxu0 0
      %572 = vmatmul.mubr.bf16.gmra.mrb[0].mxu0 %v537
      %v573 = vpop.f32.mrb[0].mxu0
      %v574 = vadd.f32 %v533, %v573
      %v575 = vpop.f32.mrb[0].mxu0
      %v576 = vadd.f32 %v533, %v575
      %v577 = vpop.f32.mrb[0].mxu0
      %v578 = vpop.f32.mrb[0].mxu0
      %579 = vdwg.mxu0
      %v580 = vmax.f32 %v574, 0.0
      %v581 = vmax.f32 %v576, 0.0
      %v582 = vld [vmem:[%s423] sm:$0xf]
      %v583 = vpack.c.bf16 %v580, %v580
      %v584 = vpack.c.bf16 %v581, %v581
      %v587 = vunpack.c.l.s4 1983009808
      %v588 = vunpack.c.0.s8 %v587
      %v589 = vlaneseq
      %v590 = vshrl.u32 %v589, 7
      %v591 = vsub.s32 %v588, %v590
      %v592 = vrot.slane %v582, %v591
      %v593 = vcombine.high %v592, %v592
      %v596 = vrot.slane %v583, 6
      %v597 = vrot.slane %v584, 6
      %vm598 = vcmask 1041408
      %v601 = vsel %vm598, %v592, %v596
      %v605 = vsel %vm598, %v593, %v597
      %609 = vrot.lane.b32.xlu0 %v601, 1
      %v610 = vpop.permute.xlu0 %609
      %611 = vrot.lane.b32.xlu0 %v605, 1
      %v612 = vpop.permute.xlu0 %611
      %v613 = vsel %vm510, %v610, %v612
      %v616 = vsel %vm513, 0, %v610
      %v618 = vmul.bf16 %v616, %v468
      %v619 = vmul.bf16 %v613, %v469
      %620 = vrot.lane.b32.xlu0 %v601, 127
      %v621 = vpop.permute.xlu0 %620
      %622 = vrot.lane.b32.xlu0 %v605, 127
      %v623 = vpop.permute.xlu0 %622
      %vm624 = vcmask 1039360
      %v625 = vsel %vm624, %v621, %v623
      %vm627 = vcmask 1039360
      %v629 = vsel %vm627, %v623, 0
      %v631 = vmul.bf16 %v625, %v476
      %v632 = vmul.bf16 %v629, %v477
      %635 = vrot.lane.b32.xlu0 %v618, 16
      %v636 = vpop.permute.xlu0 %635
      %637 = vrot.lane.b32.xlu0 %v619, 16
      %v638 = vpop.permute.xlu0 %637
      %vm639 = vcmask 130048
      %v640 = vsel %vm639, %v636, %v638
      %vm642 = vcmask 130048
      %v644 = vsel %vm642, 0, %v636
      %646 = vrot.lane.b32.xlu0 %v601, 16
      %v647 = vpop.permute.xlu0 %646
      %648 = vrot.lane.b32.xlu0 %v605, 16
      %v649 = vpop.permute.xlu0 %648
      %v650 = vsel %vm639, %v647, %v649
      %v653 = vsel %vm642, 0, %v647
      %657 = vrot.lane.b32.xlu0 %v631, 16
      %v658 = vpop.permute.xlu0 %657
      %659 = vrot.lane.b32.xlu0 %v632, 16
      %v660 = vpop.permute.xlu0 %659
      %v661 = vsel %vm639, %v658, %v660
      %v664 = vsel %vm642, 0, %v658
      %666 = vrot.lane.b32.xlu0 %v618, 112
      %v667 = vpop.permute.xlu0 %666
      %668 = vrot.lane.b32.xlu0 %v619, 112
      %v669 = vpop.permute.xlu0 %668
      %vm670 = vcmask 916480
      %v671 = vsel %vm670, %v667, %v669
      %vm673 = vcmask 916480
      %v675 = vsel %vm673, %v669, 0
      %677 = vrot.lane.b32.xlu0 %v601, 112
      %v678 = vpop.permute.xlu0 %677
      %679 = vrot.lane.b32.xlu0 %v605, 112
      %v680 = vpop.permute.xlu0 %679
      %v681 = vsel %vm670, %v678, %v680
      %v684 = vsel %vm673, %v680, 0
      %686 = vrot.lane.b32.xlu0 %v631, 112
      %v687 = vpop.permute.xlu0 %686
      %688 = vrot.lane.b32.xlu0 %v632, 112
      %v689 = vpop.permute.xlu0 %688
      %v690 = vsel %vm670, %v687, %v689
      %v693 = vsel %vm673, %v689, 0
      %695 = vst [vmem:[#allocation2] sm:$0xf] %v644
      %696 = vst [vmem:[#allocation2 + $0x8] sm:$0xf] %v640
      %697 = vst [vmem:[#allocation2 + $0x10] sm:$0xf] %v653
      %698 = vst [vmem:[#allocation2 + $0x18] sm:$0xf] %v650
      %699 = vst [vmem:[#allocation2 + $0x20] sm:$0xf] %v664
      %700 = vst [vmem:[#allocation2 + $0x28] sm:$0xf] %v661
      %701 = vst [vmem:[#allocation2 + $0x30] sm:$0xf] %v618
      %702 = vst [vmem:[#allocation2 + $0x38] sm:$0xf] %v619
      %703 = vst [vmem:[#allocation2 + $0x40] sm:$0xf] %v601
      %704 = vst [vmem:[#allocation2 + $0x48] sm:$0xf] %v605
      %705 = vst [vmem:[#allocation2 + $0x50] sm:$0xf] %v631
      %706 = vst [vmem:[#allocation2 + $0x58] sm:$0xf] %v632
      %707 = vst [vmem:[#allocation2 + $0x60] sm:$0xf] %v671
      %708 = vst [vmem:[#allocation2 + $0x68] sm:$0xf] %v675
      %709 = vst [vmem:[#allocation2 + $0x70] sm:$0xf] %v681
      %710 = vst [vmem:[#allocation2 + $0x78] sm:$0xf] %v684
      %711 = vst [vmem:[#allocation2 + $0x80] sm:$0xf] %v690
      %712 = vst [vmem:[#allocation2 + $0x88] sm:$0xf] %v693
      %v713 = vld [vmem:[%s4] sm:$0xff]
      %v714 = vld [vmem:[#allocation2] sm:$0xff]
      %v715 = vld [vmem:[#allocation2 + $0x8] sm:$0xff]
      %v716 = vld [vmem:[#allocation2 + $0x10] sm:$0xff]
      %v717 = vld [vmem:[#allocation2 + $0x18] sm:$0xff]
      %v718 = vld [vmem:[#allocation2 + $0x20] sm:$0xff]
      %v719 = vld [vmem:[#allocation2 + $0x28] sm:$0xff]
      %v720 = vld [vmem:[#allocation2 + $0x30] sm:$0xff]
      %v721 = vld [vmem:[#allocation2 + $0x38] sm:$0xff]
      %v722 = vld [vmem:[#allocation2 + $0x40] sm:$0xff]
      %v723 = vld [vmem:[#allocation2 + $0x48] sm:$0xff]
      %v724 = vld [vmem:[#allocation2 + $0x50] sm:$0xff]
      %v725 = vld [vmem:[#allocation2 + $0x58] sm:$0xff]
      %v726 = vld [vmem:[#allocation2 + $0x60] sm:$0xff]
      %v727 = vld [vmem:[#allocation2 + $0x68] sm:$0xff]
      %v728 = vld [vmem:[#allocation2 + $0x70] sm:$0xff]
      %v729 = vld [vmem:[#allocation2 + $0x78] sm:$0xff]
      %v730 = vld [vmem:[#allocation2 + $0x80] sm:$0xff]
      %v731 = vld [vmem:[#allocation2 + $0x88] sm:$0xff]
      %v732 = vld [vmem:[%s5] sm:$0xff]
      %734 = vset.pattern.permute.xlu0 0
      %735 = vperm.xlu0 %734, %v732
      %v736 = vpop.permute.xlu0 %735
      %v739 = vunpack.c.l.b16 %v713
      %v740 = vunpack.c.h.b16 %v713
      %v741 = vpack.c.b16 %v739, %v739
      %v742 = vpack.c.b16 %v740, %v740
      %v745 = vsel %vm642, %v742, 0
      %747 = vmatprep.subr.bf16.mxu0 %v715
      %748 = vmatpush1.bf16.msra.mxu0 %v714
      %749 = vmatprep.subr.bf16.mxu0 %v717
      %750 = vmatpush1.bf16.msra.mxu0 %v716
      %751 = vmatprep.subr.bf16.mxu0 %v719
      %752 = vmatpush1.bf16.msra.mxu0 %v718
      %753 = vmatprep.subr.bf16.mxu0 %v721
      %754 = vmatpush1.bf16.msra.mxu0 %v720
      %755 = vmatprep.subr.bf16.mxu0 %v723
      %756 = vmatpush1.bf16.msra.mxu0 %v722
      %757 = vmatprep.subr.bf16.mxu0 %v725
      %758 = vmatpush1.bf16.msra.mxu0 %v724
      %759 = vmatprep.subr.bf16.mxu0 %v727
      %760 = vmatpush1.bf16.msra.mxu0 %v726
      %761 = vmatprep.subr.bf16.mxu0 %v729
      %762 = vmatpush1.bf16.msra.mxu0 %v728
      %763 = vmatprep.subr.bf16.mxu0 %v731
      %764 = vmatpush1.bf16.msra.mxu0 %v730
      %765 = vmatprep.subr.bf16.mxu0 0
      %766 = vmatpush1.bf16.msra.mxu0 0
      %767 = vmatprep.subr.bf16.mxu0 0
      %768 = vmatpush1.bf16.msra.mxu0 0
      %769 = vmatprep.subr.bf16.mxu0 0
      %770 = vmatpush1.bf16.msra.mxu0 0
      %771 = vmatprep.subr.bf16.mxu0 0
      %772 = vmatpush1.bf16.msra.mxu0 0
      %773 = vmatprep.subr.bf16.mxu0 0
      %774 = vmatpush1.bf16.msra.mxu0 0
      %775 = vmatprep.subr.bf16.mxu0 0
      %776 = vmatpush1.bf16.msra.mxu0 0
      %777 = vmatprep.subr.bf16.mxu0 0
      %778 = vmatpush1.bf16.msra.mxu0 0
      %779 = vmatprep.mubr.bf16.mxu0 %v745
      %780 = vmatmul.mubr.bf16.gmra.mrb[0].mxu0 %v741
      %v781 = vpop.f32.mrb[0].mxu0
      %v782 = vadd.f32 %v736, %v781
      %v783 = vpop.f32.mrb[0].mxu0
      %v784 = vadd.f32 %v736, %v783
      %v785 = vpop.f32.mrb[0].mxu0
      %v786 = vpop.f32.mrb[0].mxu0
      %787 = vdwg.mxu0
      %v788 = vmax.f32 %v782, 0.0
      %v789 = vmax.f32 %v784, 0.0
      %v790 = vpack.c.bf16 %v788, %v788
      %v791 = vpack.c.bf16 %v789, %v789
      %794 = vrot.lane.b32.xlu0 %v790, 1
      %v795 = vpop.permute.xlu0 %794
      %796 = vrot.lane.b32.xlu0 %v791, 1
      %v797 = vpop.permute.xlu0 %796
      %v798 = vsel %vm510, %v795, %v797
      %v801 = vsel %vm513, 0, %v795
      %v803 = vmul.bf16 %v801, %v468
      %v804 = vmul.bf16 %v798, %v469
      %805 = vrot.lane.b32.xlu0 %v790, 127
      %v806 = vpop.permute.xlu0 %805
      %807 = vrot.lane.b32.xlu0 %v791, 127
      %v808 = vpop.permute.xlu0 %807
      %v809 = vsel %vm624, %v806, %v808
      %v812 = vsel %vm627, %v808, 0
      %v814 = vmul.bf16 %v809, %v476
      %v815 = vmul.bf16 %v812, %v477
      %818 = vrot.lane.b32.xlu0 %v803, 16
      %v819 = vpop.permute.xlu0 %818
      %820 = vrot.lane.b32.xlu0 %v804, 16
      %v821 = vpop.permute.xlu0 %820
      %v822 = vsel %vm639, %v819, %v821
      %v825 = vsel %vm642, 0, %v819
      %827 = vrot.lane.b32.xlu0 %v790, 16
      %v828 = vpop.permute.xlu0 %827
      %829 = vrot.lane.b32.xlu0 %v791, 16
      %v830 = vpop.permute.xlu0 %829
      %v831 = vsel %vm639, %v828, %v830
      %v834 = vsel %vm642, 0, %v828
      %838 = vrot.lane.b32.xlu0 %v814, 16
      %v839 = vpop.permute.xlu0 %838
      %840 = vrot.lane.b32.xlu0 %v815, 16
      %v841 = vpop.permute.xlu0 %840
      %v842 = vsel %vm639, %v839, %v841
      %v845 = vsel %vm642, 0, %v839
      %847 = vrot.lane.b32.xlu0 %v803, 112
      %v848 = vpop.permute.xlu0 %847
      %849 = vrot.lane.b32.xlu0 %v804, 112
      %v850 = vpop.permute.xlu0 %849
      %v851 = vsel %vm670, %v848, %v850
      %v854 = vsel %vm673, %v850, 0
      %856 = vrot.lane.b32.xlu0 %v790, 112
      %v857 = vpop.permute.xlu0 %856
      %858 = vrot.lane.b32.xlu0 %v791, 112
      %v859 = vpop.permute.xlu0 %858
      %v860 = vsel %vm670, %v857, %v859
      %v863 = vsel %vm673, %v859, 0
      %865 = vrot.lane.b32.xlu0 %v814, 112
      %v866 = vpop.permute.xlu0 %865
      %867 = vrot.lane.b32.xlu0 %v815, 112
      %v868 = vpop.permute.xlu0 %867
      %v869 = vsel %vm670, %v866, %v868
      %v872 = vsel %vm673, %v868, 0
      %874 = vst [vmem:[#allocation2] sm:$0x3] %v825
      %875 = vst [vmem:[#allocation2 + $0x8] sm:$0x3] %v822
      %876 = vst [vmem:[#allocation2 + $0x10] sm:$0x3] %v834
      %877 = vst [vmem:[#allocation2 + $0x18] sm:$0x3] %v831
      %878 = vst [vmem:[#allocation2 + $0x20] sm:$0x3] %v845
      %879 = vst [vmem:[#allocation2 + $0x28] sm:$0x3] %v842
      %880 = vst [vmem:[#allocation2 + $0x30] sm:$0x3] %v803
      %881 = vst [vmem:[#allocation2 + $0x38] sm:$0x3] %v804
      %882 = vst [vmem:[#allocation2 + $0x40] sm:$0x3] %v790
      %883 = vst [vmem:[#allocation2 + $0x48] sm:$0x3] %v791
      %884 = vst [vmem:[#allocation2 + $0x50] sm:$0x3] %v814
      %885 = vst [vmem:[#allocation2 + $0x58] sm:$0x3] %v815
      %886 = vst [vmem:[#allocation2 + $0x60] sm:$0x3] %v851
      %887 = vst [vmem:[#allocation2 + $0x68] sm:$0x3] %v854
      %888 = vst [vmem:[#allocation2 + $0x70] sm:$0x3] %v860
      %889 = vst [vmem:[#allocation2 + $0x78] sm:$0x3] %v863
      %890 = vst [vmem:[#allocation2 + $0x80] sm:$0x3] %v869
      %891 = vst [vmem:[#allocation2 + $0x88] sm:$0x3] %v872
      %v892 = vld [vmem:[%s6] sm:$0xf]
      %v893 = vld [vmem:[#allocation2] sm:$0xff]
      %v894 = vld [vmem:[#allocation2 + $0x8] sm:$0xff]
      %v895 = vld [vmem:[#allocation2 + $0x10] sm:$0xff]
      %v896 = vld [vmem:[#allocation2 + $0x18] sm:$0xff]
      %v897 = vld [vmem:[#allocation2 + $0x20] sm:$0xff]
      %v898 = vld [vmem:[#allocation2 + $0x28] sm:$0xff]
      %v899 = vld [vmem:[#allocation2 + $0x30] sm:$0xff]
      %v900 = vld [vmem:[#allocation2 + $0x38] sm:$0xff]
      %v901 = vld [vmem:[#allocation2 + $0x40] sm:$0xff]
      %v902 = vld [vmem:[#allocation2 + $0x48] sm:$0xff]
      %v903 = vld [vmem:[#allocation2 + $0x50] sm:$0xff]
      %v904 = vld [vmem:[#allocation2 + $0x58] sm:$0xff]
      %v905 = vld [vmem:[#allocation2 + $0x60] sm:$0xff]
      %v906 = vld [vmem:[#allocation2 + $0x68] sm:$0xff]
      %v907 = vld [vmem:[#allocation2 + $0x70] sm:$0xff]
      %v908 = vld [vmem:[#allocation2 + $0x78] sm:$0xff]
      %v909 = vld [vmem:[#allocation2 + $0x80] sm:$0xff]
      %v910 = vld [vmem:[#allocation2 + $0x88] sm:$0xff]
      %v911 = vld [vmem:[%s7] sm:$0xf]
      %913 = vset.pattern.permute.xlu0 0
      %914 = vperm.xlu0 %913, %v911
      %v915 = vpop.permute.xlu0 %914
      %v919 = vunpack.c.l.s4 1983009808
      %v920 = vunpack.c.0.s8 %v919
      %v921 = vlaneseq
      %v922 = vshrl.u32 %v921, 7
      %v923 = vsub.s32 %v920, %v922
      %v924 = vrot.slane %v892, %v923
      %v925 = vcombine.high %v924, %v924
      %v928 = vsel %vm642, %v925, 0
      %930 = vmatprep.subr.bf16.mxu0 %v894
      %931 = vmatpush1.bf16.msra.mxu0 %v893
      %932 = vmatprep.subr.bf16.mxu0 %v896
      %933 = vmatpush1.bf16.msra.mxu0 %v895
      %934 = vmatprep.subr.bf16.mxu0 %v898
      %935 = vmatpush1.bf16.msra.mxu0 %v897
      %936 = vmatprep.subr.bf16.mxu0 %v900
      %937 = vmatpush1.bf16.msra.mxu0 %v899
      %938 = vmatprep.subr.bf16.mxu0 %v902
      %939 = vmatpush1.bf16.msra.mxu0 %v901
      %940 = vmatprep.subr.bf16.mxu0 %v904
      %941 = vmatpush1.bf16.msra.mxu0 %v903
      %942 = vmatprep.subr.bf16.mxu0 %v906
      %943 = vmatpush1.bf16.msra.mxu0 %v905
      %944 = vmatprep.subr.bf16.mxu0 %v908
      %945 = vmatpush1.bf16.msra.mxu0 %v907
      %946 = vmatprep.subr.bf16.mxu0 %v910
      %947 = vmatpush1.bf16.msra.mxu0 %v909
      %948 = vmatprep.subr.bf16.mxu0 0
      %949 = vmatpush1.bf16.msra.mxu0 0
      %950 = vmatprep.subr.bf16.mxu0 0
      %951 = vmatpush1.bf16.msra.mxu0 0
      %952 = vmatprep.subr.bf16.mxu0 0
      %953 = vmatpush1.bf16.msra.mxu0 0
      %954 = vmatprep.subr.bf16.mxu0 0
      %955 = vmatpush1.bf16.msra.mxu0 0
      %956 = vmatprep.subr.bf16.mxu0 0
      %957 = vmatpush1.bf16.msra.mxu0 0
      %958 = vmatprep.subr.bf16.mxu0 0
      %959 = vmatpush1.bf16.msra.mxu0 0
      %960 = vmatprep.subr.bf16.mxu0 0
      %961 = vmatpush1.bf16.msra.mxu0 0
      %962 = vmatprep.mubr.bf16.mxu0 %v928
      %963 = vmatmul.mubr.bf16.gmra.mrb[0].mxu0 %v924
      %v964 = vpop.f32.mrb[0].mxu0
      %v965 = vadd.f32 %v915, %v964
      %v966 = vpop.f32.mrb[0].mxu0
      %v967 = vadd.f32 %v915, %v966
      %v968 = vpop.f32.mrb[0].mxu0
      %v969 = vpop.f32.mrb[0].mxu0
      %970 = vdwg.mxu0
      %v973 = vrot.slane %v782, 4
      %v974 = vrot.slane %v784, 4
      %v977 = vadd.f32 %v965, %v973
      %v978 = vadd.f32 %v967, %v974
      %v979 = vmax.f32 %v977, 0.0
      %v980 = vmax.f32 %v978, 0.0
      %v981 = vpack.c.bf16 %v979, %v979
      %v982 = vpack.c.bf16 %v980, %v980
      %985 = vrot.lane.b32.xlu0 %v981, 1
      %v986 = vpop.permute.xlu0 %985
      %987 = vrot.lane.b32.xlu0 %v982, 1
      %v988 = vpop.permute.xlu0 %987
      %v989 = vsel %vm510, %v986, %v988
      %v992 = vsel %vm513, 0, %v986
      %v994 = vmul.bf16 %v992, %v468
      %v995 = vmul.bf16 %v989, %v469
      %996 = vrot.lane.b32.xlu0 %v981, 127
      %v997 = vpop.permute.xlu0 %996
      %998 = vrot.lane.b32.xlu0 %v982, 127
      %v999 = vpop.permute.xlu0 %998
      %v1000 = vsel %vm624, %v997, %v999
      %v1003 = vsel %vm627, %v999, 0
      %v1005 = vmul.bf16 %v1000, %v476
      %v1006 = vmul.bf16 %v1003, %v477
      %1009 = vrot.lane.b32.xlu0 %v994, 16
      %v1010 = vpop.permute.xlu0 %1009
      %1011 = vrot.lane.b32.xlu0 %v995, 16
      %v1012 = vpop.permute.xlu0 %1011
      %v1013 = vsel %vm639, %v1010, %v1012
      %v1016 = vsel %vm642, 0, %v1010
      %1018 = vrot.lane.b32.xlu0 %v981, 16
      %v1019 = vpop.permute.xlu0 %1018
      %1020 = vrot.lane.b32.xlu0 %v982, 16
      %v1021 = vpop.permute.xlu0 %1020
      %v1022 = vsel %vm639, %v1019, %v1021
      %v1025 = vsel %vm642, 0, %v1019
      %1029 = vrot.lane.b32.xlu0 %v1005, 16
      %v1030 = vpop.permute.xlu0 %1029
      %1031 = vrot.lane.b32.xlu0 %v1006, 16
      %v1032 = vpop.permute.xlu0 %1031
      %v1033 = vsel %vm639, %v1030, %v1032
      %v1036 = vsel %vm642, 0, %v1030
      %1038 = vrot.lane.b32.xlu0 %v994, 112
      %v1039 = vpop.permute.xlu0 %1038
      %1040 = vrot.lane.b32.xlu0 %v995, 112
      %v1041 = vpop.permute.xlu0 %1040
      %v1042 = vsel %vm670, %v1039, %v1041
      %v1045 = vsel %vm673, %v1041, 0
      %1047 = vrot.lane.b32.xlu0 %v981, 112
      %v1048 = vpop.permute.xlu0 %1047
      %1049 = vrot.lane.b32.xlu0 %v982, 112
      %v1050 = vpop.permute.xlu0 %1049
      %v1051 = vsel %vm670, %v1048, %v1050
      %v1054 = vsel %vm673, %v1050, 0
      %1056 = vrot.lane.b32.xlu0 %v1005, 112
      %v1057 = vpop.permute.xlu0 %1056
      %1058 = vrot.lane.b32.xlu0 %v1006, 112
      %v1059 = vpop.permute.xlu0 %1058
      %v1060 = vsel %vm670, %v1057, %v1059
      %v1063 = vsel %vm673, %v1059, 0
      %1065 = vst [vmem:[#allocation2] sm:$0x3] %v1016
      %1066 = vst [vmem:[#allocation2 + $0x8] sm:$0x3] %v1013
      %1067 = vst [vmem:[#allocation2 + $0x10] sm:$0x3] %v1025
      %1068 = vst [vmem:[#allocation2 + $0x18] sm:$0x3] %v1022
      %1069 = vst [vmem:[#allocation2 + $0x20] sm:$0x3] %v1036
      %1070 = vst [vmem:[#allocation2 + $0x28] sm:$0x3] %v1033
      %1071 = vst [vmem:[#allocation2 + $0x30] sm:$0x3] %v994
      %1072 = vst [vmem:[#allocation2 + $0x38] sm:$0x3] %v995
      %1073 = vst [vmem:[#allocation2 + $0x40] sm:$0x3] %v981
      %1074 = vst [vmem:[#allocation2 + $0x48] sm:$0x3] %v982
      %1075 = vst [vmem:[#allocation2 + $0x50] sm:$0x3] %v1005
      %1076 = vst [vmem:[#allocation2 + $0x58] sm:$0x3] %v1006
      %1077 = vst [vmem:[#allocation2 + $0x60] sm:$0x3] %v1042
      %1078 = vst [vmem:[#allocation2 + $0x68] sm:$0x3] %v1045
      %1079 = vst [vmem:[#allocation2 + $0x70] sm:$0x3] %v1051
      %1080 = vst [vmem:[#allocation2 + $0x78] sm:$0x3] %v1054
      %1081 = vst [vmem:[#allocation2 + $0x80] sm:$0x3] %v1060
      %1082 = vst [vmem:[#allocation2 + $0x88] sm:$0x3] %v1063
      %v1083 = vld [vmem:[%s8] sm:$0xf]
      %v1084 = vld [vmem:[#allocation2] sm:$0xff]
      %v1085 = vld [vmem:[#allocation2 + $0x8] sm:$0xff]
      %v1086 = vld [vmem:[#allocation2 + $0x10] sm:$0xff]
      %v1087 = vld [vmem:[#allocation2 + $0x18] sm:$0xff]
      %v1088 = vld [vmem:[#allocation2 + $0x20] sm:$0xff]
      %v1089 = vld [vmem:[#allocation2 + $0x28] sm:$0xff]
      %v1090 = vld [vmem:[#allocation2 + $0x30] sm:$0xff]
      %v1091 = vld [vmem:[#allocation2 + $0x38] sm:$0xff]
      %v1092 = vld [vmem:[#allocation2 + $0x40] sm:$0xff]
      %v1093 = vld [vmem:[#allocation2 + $0x48] sm:$0xff]
      %v1094 = vld [vmem:[#allocation2 + $0x50] sm:$0xff]
      %v1095 = vld [vmem:[#allocation2 + $0x58] sm:$0xff]
      %v1096 = vld [vmem:[#allocation2 + $0x60] sm:$0xff]
      %v1097 = vld [vmem:[#allocation2 + $0x68] sm:$0xff]
      %v1098 = vld [vmem:[#allocation2 + $0x70] sm:$0xff]
      %v1099 = vld [vmem:[#allocation2 + $0x78] sm:$0xff]
      %v1100 = vld [vmem:[#allocation2 + $0x80] sm:$0xff]
      %v1101 = vld [vmem:[#allocation2 + $0x88] sm:$0xff]
      %v1102 = vld [vmem:[%s9] sm:$0xf]
      %1104 = vset.pattern.permute.xlu0 0
      %1105 = vperm.xlu0 %1104, %v1102
      %v1106 = vpop.permute.xlu0 %1105
      %v1110 = vunpack.c.l.s4 1983009808
      %v1111 = vunpack.c.0.s8 %v1110
      %v1112 = vlaneseq
      %v1113 = vshrl.u32 %v1112, 7
      %v1114 = vsub.s32 %v1111, %v1113
      %v1115 = vrot.slane %v1083, %v1114
      %v1116 = vcombine.high %v1115, %v1115
      %v1119 = vsel %vm642, %v1116, 0
      %1121 = vmatprep.subr.bf16.mxu0 %v1085
      %1122 = vmatpush1.bf16.msra.mxu0 %v1084
      %1123 = vmatprep.subr.bf16.mxu0 %v1087
      %1124 = vmatpush1.bf16.msra.mxu0 %v1086
      %1125 = vmatprep.subr.bf16.mxu0 %v1089
      %1126 = vmatpush1.bf16.msra.mxu0 %v1088
      %1127 = vmatprep.subr.bf16.mxu0 %v1091
      %1128 = vmatpush1.bf16.msra.mxu0 %v1090
      %1129 = vmatprep.subr.bf16.mxu0 %v1093
      %1130 = vmatpush1.bf16.msra.mxu0 %v1092
      %1131 = vmatprep.subr.bf16.mxu0 %v1095
      %1132 = vmatpush1.bf16.msra.mxu0 %v1094
      %1133 = vmatprep.subr.bf16.mxu0 %v1097
      %1134 = vmatpush1.bf16.msra.mxu0 %v1096
      %1135 = vmatprep.subr.bf16.mxu0 %v1099
      %1136 = vmatpush1.bf16.msra.mxu0 %v1098
      %1137 = vmatprep.subr.bf16.mxu0 %v1101
      %1138 = vmatpush1.bf16.msra.mxu0 %v1100
      %1139 = vmatprep.subr.bf16.mxu0 0
      %1140 = vmatpush1.bf16.msra.mxu0 0
      %1141 = vmatprep.subr.bf16.mxu0 0
      %1142 = vmatpush1.bf16.msra.mxu0 0
      %1143 = vmatprep.subr.bf16.mxu0 0
      %1144 = vmatpush1.bf16.msra.mxu0 0
      %1145 = vmatprep.subr.bf16.mxu0 0
      %1146 = vmatpush1.bf16.msra.mxu0 0
      %1147 = vmatprep.subr.bf16.mxu0 0
      %1148 = vmatpush1.bf16.msra.mxu0 0
      %1149 = vmatprep.subr.bf16.mxu0 0
      %1150 = vmatpush1.bf16.msra.mxu0 0
      %1151 = vmatprep.subr.bf16.mxu0 0
      %1152 = vmatpush1.bf16.msra.mxu0 0
      %1153 = vmatprep.mubr.bf16.mxu0 %v1119
      %1154 = vmatmul.mubr.bf16.gmra.mrb[0].mxu0 %v1115
      %v1155 = vpop.f32.mrb[0].mxu0
      %v1156 = vadd.f32 %v1106, %v1155
      %v1157 = vpop.f32.mrb[0].mxu0
      %v1158 = vadd.f32 %v1106, %v1157
      %v1159 = vpop.f32.mrb[0].mxu0
      %v1160 = vpop.f32.mrb[0].mxu0
      %1161 = vdwg.mxu0
      %v1162 = vmax.f32 %v1156, 0.0
      %v1163 = vmax.f32 %v1158, 0.0
      %v1164 = vpack.c.bf16 %v1162, %v1162
      %v1165 = vpack.c.bf16 %v1163, %v1163
      %1168 = vrot.lane.b32.xlu0 %v1164, 1
      %v1169 = vpop.permute.xlu0 %1168
      %1170 = vrot.lane.b32.xlu0 %v1165, 1
      %v1171 = vpop.permute.xlu0 %1170
      %v1172 = vsel %vm510, %v1169, %v1171
      %v1175 = vsel %vm513, 0, %v1169
      %v1177 = vmul.bf16 %v1175, %v468
      %v1178 = vmul.bf16 %v1172, %v469
      %1179 = vrot.lane.b32.xlu0 %v1164, 127
      %v1180 = vpop.permute.xlu0 %1179
      %1181 = vrot.lane.b32.xlu0 %v1165, 127
      %v1182 = vpop.permute.xlu0 %1181
      %v1183 = vsel %vm624, %v1180, %v1182
      %v1186 = vsel %vm627, %v1182, 0
      %v1188 = vmul.bf16 %v1183, %v476
      %v1189 = vmul.bf16 %v1186, %v477
      %1192 = vrot.lane.b32.xlu0 %v1177, 16
      %v1193 = vpop.permute.xlu0 %1192
      %1194 = vrot.lane.b32.xlu0 %v1178, 16
      %v1195 = vpop.permute.xlu0 %1194
      %v1196 = vsel %vm639, %v1193, %v1195
      %v1199 = vsel %vm642, 0, %v1193
      %1201 = vrot.lane.b32.xlu0 %v1164, 16
      %v1202 = vpop.permute.xlu0 %1201
      %1203 = vrot.lane.b32.xlu0 %v1165, 16
      %v1204 = vpop.permute.xlu0 %1203
      %v1205 = vsel %vm639, %v1202, %v1204
      %v1208 = vsel %vm642, 0, %v1202
      %1212 = vrot.lane.b32.xlu0 %v1188, 16
      %v1213 = vpop.permute.xlu0 %1212
      %1214 = vrot.lane.b32.xlu0 %v1189, 16
      %v1215 = vpop.permute.xlu0 %1214
      %v1216 = vsel %vm639, %v1213, %v1215
      %v1219 = vsel %vm642, 0, %v1213
      %1221 = vrot.lane.b32.xlu0 %v1177, 112
      %v1222 = vpop.permute.xlu0 %1221
      %1223 = vrot.lane.b32.xlu0 %v1178, 112
      %v1224 = vpop.permute.xlu0 %1223
      %v1225 = vsel %vm670, %v1222, %v1224
      %v1228 = vsel %vm673, %v1224, 0
      %1230 = vrot.lane.b32.xlu0 %v1164, 112
      %v1231 = vpop.permute.xlu0 %1230
      %1232 = vrot.lane.b32.xlu0 %v1165, 112
      %v1233 = vpop.permute.xlu0 %1232
      %v1234 = vsel %vm670, %v1231, %v1233
      %v1237 = vsel %vm673, %v1233, 0
      %1239 = vrot.lane.b32.xlu0 %v1188, 112
      %v1240 = vpop.permute.xlu0 %1239
      %1241 = vrot.lane.b32.xlu0 %v1189, 112
      %v1242 = vpop.permute.xlu0 %1241
      %v1243 = vsel %vm670, %v1240, %v1242
      %v1246 = vsel %vm673, %v1242, 0
      %1248 = vst [vmem:[#allocation2] sm:$0x3] %v1199
      %1249 = vst [vmem:[#allocation2 + $0x8] sm:$0x3] %v1196
      %1250 = vst [vmem:[#allocation2 + $0x10] sm:$0x3] %v1208
      %1251 = vst [vmem:[#allocation2 + $0x18] sm:$0x3] %v1205
      %1252 = vst [vmem:[#allocation2 + $0x20] sm:$0x3] %v1219
      %1253 = vst [vmem:[#allocation2 + $0x28] sm:$0x3] %v1216
      %1254 = vst [vmem:[#allocation2 + $0x30] sm:$0x3] %v1177
      %1255 = vst [vmem:[#allocation2 + $0x38] sm:$0x3] %v1178
      %1256 = vst [vmem:[#allocation2 + $0x40] sm:$0x3] %v1164
      %1257 = vst [vmem:[#allocation2 + $0x48] sm:$0x3] %v1165
      %1258 = vst [vmem:[#allocation2 + $0x50] sm:$0x3] %v1188
      %1259 = vst [vmem:[#allocation2 + $0x58] sm:$0x3] %v1189
      %1260 = vst [vmem:[#allocation2 + $0x60] sm:$0x3] %v1225
      %1261 = vst [vmem:[#allocation2 + $0x68] sm:$0x3] %v1228
      %1262 = vst [vmem:[#allocation2 + $0x70] sm:$0x3] %v1234
      %1263 = vst [vmem:[#allocation2 + $0x78] sm:$0x3] %v1237
      %1264 = vst [vmem:[#allocation2 + $0x80] sm:$0x3] %v1243
      %1265 = vst [vmem:[#allocation2 + $0x88] sm:$0x3] %v1246
      %v1266 = vld [vmem:[%s10] sm:$0xf]
      %v1267 = vld [vmem:[#allocation2] sm:$0xff]
      %v1268 = vld [vmem:[#allocation2 + $0x8] sm:$0xff]
      %v1269 = vld [vmem:[#allocation2 + $0x10] sm:$0xff]
      %v1270 = vld [vmem:[#allocation2 + $0x18] sm:$0xff]
      %v1271 = vld [vmem:[#allocation2 + $0x20] sm:$0xff]
      %v1272 = vld [vmem:[#allocation2 + $0x28] sm:$0xff]
      %v1273 = vld [vmem:[#allocation2 + $0x30] sm:$0xff]
      %v1274 = vld [vmem:[#allocation2 + $0x38] sm:$0xff]
      %v1275 = vld [vmem:[#allocation2 + $0x40] sm:$0xff]
      %v1276 = vld [vmem:[#allocation2 + $0x48] sm:$0xff]
      %v1277 = vld [vmem:[#allocation2 + $0x50] sm:$0xff]
      %v1278 = vld [vmem:[#allocation2 + $0x58] sm:$0xff]
      %v1279 = vld [vmem:[#allocation2 + $0x60] sm:$0xff]
      %v1280 = vld [vmem:[#allocation2 + $0x68] sm:$0xff]
      %v1281 = vld [vmem:[#allocation2 + $0x70] sm:$0xff]
      %v1282 = vld [vmem:[#allocation2 + $0x78] sm:$0xff]
      %v1283 = vld [vmem:[#allocation2 + $0x80] sm:$0xff]
      %v1284 = vld [vmem:[#allocation2 + $0x88] sm:$0xff]
      %v1285 = vld [vmem:[%s11] sm:$0xf]
      %1287 = vset.pattern.permute.xlu0 0
      %1288 = vperm.xlu0 %1287, %v1285
      %v1289 = vpop.permute.xlu0 %1288
      %v1293 = vunpack.c.l.s4 1983009808
      %v1294 = vunpack.c.0.s8 %v1293
      %v1295 = vlaneseq
      %v1296 = vshrl.u32 %v1295, 7
      %v1297 = vsub.s32 %v1294, %v1296
      %v1298 = vrot.slane %v1266, %v1297
      %v1299 = vcombine.high %v1298, %v1298
      %v1302 = vsel %vm642, %v1299, 0
      %1304 = vmatprep.subr.bf16.mxu0 %v1268
      %1305 = vmatpush1.bf16.msra.mxu0 %v1267
      %1306 = vmatprep.subr.bf16.mxu0 %v1270
      %1307 = vmatpush1.bf16.msra.mxu0 %v1269
      %1308 = vmatprep.subr.bf16.mxu0 %v1272
      %1309 = vmatpush1.bf16.msra.mxu0 %v1271
      %1310 = vmatprep.subr.bf16.mxu0 %v1274
      %1311 = vmatpush1.bf16.msra.mxu0 %v1273
      %1312 = vmatprep.subr.bf16.mxu0 %v1276
      %1313 = vmatpush1.bf16.msra.mxu0 %v1275
      %1314 = vmatprep.subr.bf16.mxu0 %v1278
      %1315 = vmatpush1.bf16.msra.mxu0 %v1277
      %1316 = vmatprep.subr.bf16.mxu0 %v1280
      %1317 = vmatpush1.bf16.msra.mxu0 %v1279
      %1318 = vmatprep.subr.bf16.mxu0 %v1282
      %1319 = vmatpush1.bf16.msra.mxu0 %v1281
      %1320 = vmatprep.subr.bf16.mxu0 %v1284
      %1321 = vmatpush1.bf16.msra.mxu0 %v1283
      %1322 = vmatprep.subr.bf16.mxu0 0
      %1323 = vmatpush1.bf16.msra.mxu0 0
      %1324 = vmatprep.subr.bf16.mxu0 0
      %1325 = vmatpush1.bf16.msra.mxu0 0
      %1326 = vmatprep.subr.bf16.mxu0 0
      %1327 = vmatpush1.bf16.msra.mxu0 0
      %1328 = vmatprep.subr.bf16.mxu0 0
      %1329 = vmatpush1.bf16.msra.mxu0 0
      %1330 = vmatprep.subr.bf16.mxu0 0
      %1331 = vmatpush1.bf16.msra.mxu0 0
      %1332 = vmatprep.subr.bf16.mxu0 0
      %1333 = vmatpush1.bf16.msra.mxu0 0
      %1334 = vmatprep.subr.bf16.mxu0 0
      %1335 = vmatpush1.bf16.msra.mxu0 0
      %1336 = vmatprep.mubr.bf16.mxu0 %v1302
      %1337 = vmatmul.mubr.bf16.gmra.mrb[0].mxu0 %v1298
      %v1338 = vpop.f32.mrb[0].mxu0
      %v1339 = vadd.f32 %v1289, %v1338
      %v1340 = vpop.f32.mrb[0].mxu0
      %v1341 = vadd.f32 %v1289, %v1340
      %v1342 = vpop.f32.mrb[0].mxu0
      %v1343 = vpop.f32.mrb[0].mxu0
      %1344 = vdwg.mxu0
      %v1345 = vadd.f32 %v1339, %v979
      %v1346 = vadd.f32 %v1341, %v980
      %v1347 = vmax.f32 %v1345, 0.0
      %v1348 = vmax.f32 %v1346, 0.0
      %v1351 = vcombine.low %v1347, %v1348
      %1353 = vst [vmem:[%s433] sm:$0xff] %v1351
      %p1354 = scmp.lt.s32.totalorder %s23, 1
      %s1355 = scalar_select %p1354, %s23, 1
      %s1356 = smul.addr %s1355, 2
      %s1357 = smul.addr %s1356, 4
      %s1358 = scalar_lea.vmem %s12, %s1357
      // Predicated region
      $region69: #{feature_aggregator.1} parent=67 // pred_check
        %p1359 = pneg %p303
      $region70: #{feature_aggregator.1} parent=67 // pred_check_branch
        %1361 = sbr.rel (%p1359) target = $region72
      $region71: #{feature_aggregator.1} parent=67 // pred_region
        _
      $region72: #{feature_aggregator.1} parent=67 // pred_fallthru
        _
    $region68: #{feature_aggregator.1} parent=5 // pred_fallthru
      _
    %p1362 = scmp.le.s32.totalorder 2, %s18
    // Predicated region
    $region73: #{feature_aggregator.1} parent=5 // pred_check
      %p1363 = pneg %p1362
    $region74: #{feature_aggregator.1} parent=5 // pred_check_branch
      %1365 = sbr.rel (%p1363) target = $region76
    $region75: #{feature_aggregator.1} parent=5 // pred_region
      %s1366 = ssub.s32 %s18, 2
      // Predicated region
      $region77: #{feature_aggregator.1} parent=75 // pred_check
        %p1367 = pneg %p309
      $region78: #{feature_aggregator.1} parent=75 // pred_check_branch
        %1369 = sbr.rel (%p1367) target = $region80
      $region79: #{feature_aggregator.1} parent=75 // pred_region
        %p1370 = scmp.lt.s32.totalorder %s24, 1
        %s1371 = scalar_select %p1370, %s24, 1
        %s1372 = smul.addr %s1371, 2
        %s1373 = smul.addr %s1372, 4
        %s1374 = scalar_lea.vmem %s12, %s1373
      $region80: #{feature_aggregator.1} parent=75 // pred_fallthru
        _
    $region76: #{feature_aggregator.1} parent=5 // pred_fallthru
      _
  $region6: #{feature_aggregator.1} parent=0 // loop_footer
    %s22 = sadd.s32 1, %s18
  $region7: #{feature_aggregator.1} parent=0 // loop_footer_branch
    %17 = sbr.rel target = $region3
  $region8: #{feature_aggregator.1} parent=0 // loop_exit
    _

</llo_original>
